<compile_context>
chip_gen: v7x
topology: tpu7x:2x2x1
jax: 0.10.0
libtpu: 0.0.40
codegen_flags: <defaults>
</compile_context>

<pallas_src>
import jax
import jax.numpy as jnp
from jax.experimental import pallas as pl
from jax.experimental.pallas import tpu as pltpu

# ---- constants from the PyTorch module -------------------------------------
GEN_OUT = 33 * 3                  # GENERATOR_OUTPUT_IMAGE_SHAPE = 99
N_CLASSES = 3
N_CONNECTIONS = 35                # len(BODY_POSE_CONNECTIONS)
BN_EPS = 0.8                      # nn.BatchNorm1d(C, 0.8) -> second positional arg is eps
LANE = 128                        # lane-dense padded width for 99-wide tensors
PACKED_W = 2 * LANE               # packed per-row input width
LIMB_OFF = LANE                   # lane offset of limb block in the packed input
LBL_OFF = LANE + N_CONNECTIONS    # lane offset of one-hot(label) block

# MXU operand dtype (accumulation is always f32). Set jnp.float32 for exact-f32 matmuls.
MM_DTYPE = jnp.bfloat16


# ---------------------------- Pallas kernel ----------------------------------
def generator_kernel(n_ref, x_ref, vecs_ref, W0_ref, W1c_ref, W2_ref, W3_ref, W4_ref,
                     out_ref):
    Bp = x_ref.shape[0]
    n = n_ref[0]                                              # true batch size (runtime)
    inv_n = jnp.float32(1.0) / n.astype(jnp.float32)

    # (8, Bp) row-validity mask (8 identical sublanes). It feeds the MXU, so the
    # batch reductions for BatchNorm cost no VALU work and padded rows never
    # contaminate the statistics.
    ones8 = (jax.lax.broadcasted_iota(jnp.int32, (8, Bp), 1) < n).astype(jnp.float32)

    vecs = vecs_ref[...]                                      # (8, 512) packed vectors
    latb = vecs[0:1, :LANE]
    g1, b1 = vecs[1:2, :LANE], vecs[2:3, :LANE]
    g2, b2 = vecs[3:4, :256], vecs[4:5, :256]
    g3, b3 = vecs[5:6, :512], vecs[6:7, :512]

    def mm(a, w_ref):
        # bf16 (or f32) operands, f32 accumulation on the MXU.
        return jnp.dot(a.astype(w_ref.dtype), w_ref[...],
                       preferred_element_type=jnp.float32)

    def bn_leaky(x, g, b):
        # Fused training-mode BatchNorm1d(eps=0.8) + LeakyReLU(0.25).
        # Batch sums computed on the MXU via the masked ones matrix (f32 stats).
        s1 = jnp.dot(ones8, x, preferred_element_type=jnp.float32)[0:1]       # sum(x)
        s2 = jnp.dot(ones8, x * x, preferred_element_type=jnp.float32)[0:1]   # sum(x^2)
        mean = s1 * inv_n
        var = jnp.maximum(s2 * inv_n - mean * mean, 0.0)
        scale = g * jax.lax.rsqrt(var + BN_EPS)
        shift = b - mean * scale
        y = x * scale + shift
        return jnp.maximum(y, 0.25 * y)                       # leaky, 0 < alpha < 1

    x = x_ref[...]                                            # (Bp, 256) packed input
    # One K=256 pass: lanes 0..127 = latent pre-activation (lane-padded),
    #                 lanes 128..255 = label + limb contribution to layer 1.
    y0 = mm(x, W0_ref)                                        # (Bp, 256)
    z = y0[:, :LANE] + latb
    lat = jnp.maximum(z, 0.2 * z)                             # LeakyReLU(0.2)

    h = bn_leaky(mm(lat, W1c_ref) + y0[:, LANE:], g1, b1)     # (Bp, 128)
    h = bn_leaky(mm(h, W2_ref), g2, b2)                       # (Bp, 256)
    h = bn_leaky(mm(h, W3_ref), g3, b3)                       # (Bp, 512)
    out_ref[...] = jnp.tanh(mm(h, W4_ref))                    # (Bp, 128) lane-dense


# ------------------ one-time parameter preparation (hoisted) ------------------
def prepare_params(params):
    """Fold affine branches / concat permutation into kernel-ready packed weights."""
    W1 = params["W1"]                                   # (128, 297), torch (out, in)
    # Column d = 9*j + 3*part + k  ->  [o, j, part, k] -> split per branch.
    Wb = W1.reshape(128, 33, 3, 3).transpose(0, 2, 1, 3).reshape(128, 3, GEN_OUT)
    W1a = Wb[:, 0, :].T                                 # (99, 128) label slice
    W1b = Wb[:, 1, :].T                                 # (99, 128) limb slice
    W1c = Wb[:, 2, :].T                                 # (99, 128) latent slice

    emb, lblW, lblb = params["emb"], params["lblW"], params["lblb"]
    limbW, limbb = params["limbW"], params["limbb"]
    latW, latb = params["latW"], params["latb"]

    # Per-class contribution to h1 (label branch + shared limb bias), exact f32 fold.
    table = (emb @ lblW.T + lblb) @ W1a + limbb @ W1b   # (3, 128)
    limb_fused = limbW.T @ W1b                          # (35, 128)

    # Stacked first-stage weight (256, 256):
    #   cols   0..127 : latent Linear (rows 0..98 <- noise lanes), lane-padded output
    #   cols 128..255 : limb_fused (rows 128..162) + per-class table (rows 163..165)
    W0 = jnp.zeros((PACKED_W, PACKED_W), jnp.float32)
    W0 = W0.at[:GEN_OUT, :GEN_OUT].set(latW.T)
    W0 = W0.at[LIMB_OFF:LIMB_OFF + N_CONNECTIONS, LANE:].set(limb_fused)
    W0 = W0.at[LBL_OFF:LBL_OFF + N_CLASSES, LANE:].set(table)

    W1c_pad = jnp.zeros((LANE, 128), jnp.float32).at[:GEN_OUT, :].set(W1c)
    W4_pad = jnp.zeros((512, LANE), jnp.float32).at[:, :GEN_OUT].set(params["W4"].T)

    # All 1-D vectors packed into a single (8, 512) f32 block.
    vecs = jnp.zeros((8, 512), jnp.float32)
    vecs = vecs.at[0, :GEN_OUT].set(latb)
    vecs = vecs.at[1, :128].set(params["g1"]).at[2, :128].set(params["b1"])
    vecs = vecs.at[3, :256].set(params["g2"]).at[4, :256].set(params["b2"])
    vecs = vecs.at[5, :512].set(params["g3"]).at[6, :512].set(params["b3"])

    return {
        "vecs": vecs,
        "W0": W0.astype(MM_DTYPE),
        "W1c": W1c_pad.astype(MM_DTYPE),
        "W2": params["W2"].T.astype(MM_DTYPE),
        "W3": params["W3"].T.astype(MM_DTYPE),
        "W4": W4_pad.astype(MM_DTYPE),
    }


# ------------------------------ wrapper --------------------------------------
def _bucket_batch(b):
    # Sublane-aligned, power-of-two-bucketed padded batch -> few distinct Mosaic compiles.
    return 8 * pl.next_power_of_2(max(1, pl.cdiv(b, 8)))


def limb_length_generator_forward(noise, label, limb_lengths, prep):
    """noise:(B,99) f32, label:(B,) int, limb_lengths:(B,35) f32 -> (B,33,3) f32."""
    B = noise.shape[0]
    Bp = _bucket_batch(B)

    # Single packed per-batch buffer: [noise | 0-pad | limb | one_hot(label) | 0-pad].
    onehot = jax.nn.one_hot(label, N_CLASSES, dtype=jnp.float32)
    row = jnp.concatenate([
        noise.astype(jnp.float32),
        jnp.zeros((B, LANE - GEN_OUT), jnp.float32),
        limb_lengths.astype(jnp.float32),
        onehot,
        jnp.zeros((B, PACKED_W - LBL_OFF - N_CLASSES), jnp.float32),
    ], axis=1)                                               # (B, 256)
    packed = jnp.pad(row, ((0, Bp - B), (0, 0)))             # (Bp, 256)
    n_valid = jnp.full((1,), B, jnp.int32)                   # runtime scalar -> SMEM

    weight_bytes = sum(int(prep[k].size) * prep[k].dtype.itemsize
                       for k in ("vecs", "W0", "W1c", "W2", "W3", "W4"))
    flops = Bp * (2 * (PACKED_W * PACKED_W + 128 * 128 + 128 * 256 + 256 * 512 + 512 * 128)
                  + 4 * 8 * (128 + 256 + 512))
    bytes_accessed = (packed.size + Bp * LANE) * 4 + weight_bytes
    vmem_limit = int(min(64 << 20, max(16 << 20, (4 << 20) + Bp * 16 * 1024)))

    out = pl.pallas_call(
        generator_kernel,
        out_shape=jax.ShapeDtypeStruct((Bp, LANE), jnp.float32),
        in_specs=[
            pl.BlockSpec(memory_space=pltpu.MemorySpace.SMEM),    # n_valid
            pl.BlockSpec(memory_space=pltpu.MemorySpace.VMEM),    # packed input
            pl.BlockSpec(memory_space=pltpu.MemorySpace.VMEM),    # vecs
            pl.BlockSpec(memory_space=pltpu.MemorySpace.VMEM),    # W0
            pl.BlockSpec(memory_space=pltpu.MemorySpace.VMEM),    # W1c
            pl.BlockSpec(memory_space=pltpu.MemorySpace.VMEM),    # W2
            pl.BlockSpec(memory_space=pltpu.MemorySpace.VMEM),    # W3
            pl.BlockSpec(memory_space=pltpu.MemorySpace.VMEM),    # W4
        ],
        out_specs=pl.BlockSpec(memory_space=pltpu.MemorySpace.VMEM),
        compiler_params=pltpu.CompilerParams(vmem_limit_bytes=vmem_limit),
        cost_estimate=pl.CostEstimate(flops=int(flops),
                                      transcendentals=int(Bp * LANE + 1024),
                                      bytes_accessed=int(bytes_accessed)),
    )(n_valid, packed, prep["vecs"], prep["W0"], prep["W1c"],
      prep["W2"], prep["W3"], prep["W4"])
    return out[:B, :GEN_OUT].reshape(B, 33, 3)


# --------------------------- pure-JAX reference -------------------------------
def _leaky(x, alpha):
    return jnp.where(x > 0, x, alpha * x)


def _bn_train(x, gamma, beta):
    mean = jnp.mean(x, axis=0, keepdims=True)
    var = jnp.mean((x - mean) ** 2, axis=0, keepdims=True)
    return (x - mean) * jax.lax.rsqrt(var + BN_EPS) * gamma + beta


def reference_forward(noise, label, limb_lengths, params):
    B = noise.shape[0]
    onehot = jax.nn.one_hot(label, N_CLASSES, dtype=jnp.float32)
    emb = onehot @ params["emb"]
    label_out = (emb @ params["lblW"].T + params["lblb"]).reshape(B, 33, 3)
    limb_out = (limb_lengths @ params["limbW"].T + params["limbb"]).reshape(B, 33, 3)
    lat = noise @ params["latW"].T + params["latb"]
    lat = _leaky(lat, 0.2).reshape(B, 33, 3)
    combined = jnp.concatenate([label_out, limb_out, lat], axis=2).reshape(B, -1)

    h = _leaky(_bn_train(combined @ params["W1"].T, params["g1"], params["b1"]), 0.25)
    h = _leaky(_bn_train(h @ params["W2"].T, params["g2"], params["b2"]), 0.25)
    h = _leaky(_bn_train(h @ params["W3"].T, params["g3"], params["b3"]), 0.25)
    out = jnp.tanh(h @ params["W4"].T)
    return out.reshape(B, 33, 3)


# --------------------------- deterministic params ------------------------------
def init_params(key):
    ks = iter(jax.random.split(key, 16))

    def lin_w(k, out_f, in_f):
        s = 1.0 / jnp.sqrt(jnp.float32(in_f))
        return jax.random.uniform(k, (out_f, in_f), jnp.float32, -s, s)

    def lin_b(k, out_f, in_f):
        s = 1.0 / jnp.sqrt(jnp.float32(in_f))
        return jax.random.uniform(k, (out_f,), jnp.float32, -s, s)

    return {
        "emb": jax.random.normal(next(ks), (N_CLASSES, 10), jnp.float32),
        "lblW": lin_w(next(ks), GEN_OUT, 10), "lblb": lin_b(next(ks), GEN_OUT, 10),
        "limbW": lin_w(next(ks), GEN_OUT, N_CONNECTIONS),
        "limbb": lin_b(next(ks), GEN_OUT, N_CONNECTIONS),
        "latW": lin_w(next(ks), GEN_OUT, GEN_OUT), "latb": lin_b(next(ks), GEN_OUT, GEN_OUT),
        "W1": lin_w(next(ks), 128, 3 * GEN_OUT),
        "g1": jnp.ones((128,), jnp.float32), "b1": jnp.zeros((128,), jnp.float32),
        "W2": lin_w(next(ks), 256, 128),
        "g2": jnp.ones((256,), jnp.float32), "b2": jnp.zeros((256,), jnp.float32),
        "W3": lin_w(next(ks), 512, 256),
        "g3": jnp.ones((512,), jnp.float32), "b3": jnp.zeros((512,), jnp.float32),
        "W4": lin_w(next(ks), GEN_OUT, 512),
    }


if __name__ == "__main__":
    B = 4
    key = jax.random.PRNGKey(0)
    kp, kn, kl, kc = jax.random.split(key, 4)

    params = init_params(kp)
    prep = prepare_params(params)                       # one-time, hoisted out of forward
    noise = jax.random.normal(kn, (B, GEN_OUT), jnp.float32)
    limb_lengths = jax.random.uniform(kl, (B, N_CONNECTIONS), jnp.float32)
    label = jax.random.randint(kc, (B,), 0, N_CLASSES, jnp.int32)

    fwd = jax.jit(limb_length_generator_forward)
    out = fwd(noise, label, limb_lengths, prep)
    out = jax.block_until_ready(out)

    ref = reference_forward(noise, label, limb_lengths, params)
    assert out.shape == (B, 33, 3), out.shape
    assert bool(jnp.all(jnp.isfinite(out)))
    # bf16 MXU operands with f32 accumulation -> small deviation vs pure-f32 reference.
    assert bool(jnp.allclose(out, ref, atol=3e-2, rtol=3e-2)), "mismatch vs JAX reference"

    print("KERNEL_OK")
</pallas_src>

<mosaic_0001>
module attributes {stable_mosaic.version = 11 : i64} {
  func.func @generator_kernel(%arg0: memref<1xi32, #tpu.memory_space<smem>>, %arg1: memref<8x256xf32, #tpu.memory_space<vmem>>, %arg2: memref<8x512xf32, #tpu.memory_space<vmem>>, %arg3: memref<256x256xbf16, #tpu.memory_space<vmem>>, %arg4: memref<128x128xbf16, #tpu.memory_space<vmem>>, %arg5: memref<128x256xbf16, #tpu.memory_space<vmem>>, %arg6: memref<256x512xbf16, #tpu.memory_space<vmem>>, %arg7: memref<512x128xbf16, #tpu.memory_space<vmem>>, %arg8: memref<8x128xf32, #tpu.memory_space<vmem>>) attributes {dimension_semantics = [], scalar_prefetch = 0 : i64, scratch_operands = 0 : i64, tpu.core_type = #tpu.core_type<tc>} {
    %c0 = arith.constant 0 : index
    %0 = memref.load %arg0[%c0] : memref<1xi32, #tpu.memory_space<smem>>
    %1 = arith.sitofp %0 : i32 to f32
    %cst = arith.constant 1.000000e+00 : f32
    %2 = arith.divf %cst, %1 : f32
    %3 = tpu.iota {dimensions = array<i32: 1>} : vector<8x8xi32>
    %4 = vector.broadcast %0 : i32 to vector<8x8xi32>
    %5 = arith.cmpi slt, %3, %4 : vector<8x8xi32>
    %6 = arith.extui %5 : vector<8x8xi1> to vector<8x8xi32>
    %7 = arith.sitofp %6 : vector<8x8xi32> to vector<8x8xf32>
    %c0_0 = arith.constant 0 : index
    %c0_1 = arith.constant 0 : index
    %8 = vector.load %arg2[%c0_0, %c0_1] : memref<8x512xf32, #tpu.memory_space<vmem>>, vector<8x512xf32>
    %9 = vector.extract_strided_slice %8 {offsets = [0, 0], sizes = [1, 128], strides = [1, 1]} : vector<8x512xf32> to vector<1x128xf32>
    %10 = vector.extract_strided_slice %8 {offsets = [1, 0], sizes = [1, 128], strides = [1, 1]} : vector<8x512xf32> to vector<1x128xf32>
    %11 = vector.extract_strided_slice %8 {offsets = [2, 0], sizes = [1, 128], strides = [1, 1]} : vector<8x512xf32> to vector<1x128xf32>
    %12 = vector.extract_strided_slice %8 {offsets = [3, 0], sizes = [1, 256], strides = [1, 1]} : vector<8x512xf32> to vector<1x256xf32>
    %13 = vector.extract_strided_slice %8 {offsets = [4, 0], sizes = [1, 256], strides = [1, 1]} : vector<8x512xf32> to vector<1x256xf32>
    %14 = vector.extract_strided_slice %8 {offsets = [5, 0], sizes = [1, 512], strides = [1, 1]} : vector<8x512xf32> to vector<1x512xf32>
    %15 = vector.extract_strided_slice %8 {offsets = [6, 0], sizes = [1, 512], strides = [1, 1]} : vector<8x512xf32> to vector<1x512xf32>
    %c0_2 = arith.constant 0 : index
    %c0_3 = arith.constant 0 : index
    %16 = vector.load %arg1[%c0_2, %c0_3] : memref<8x256xf32, #tpu.memory_space<vmem>>, vector<8x256xf32>
    %17 = arith.truncf %16 : vector<8x256xf32> to vector<8x256xbf16>
    %c0_4 = arith.constant 0 : index
    %c0_5 = arith.constant 0 : index
    %18 = vector.load %arg3[%c0_4, %c0_5] : memref<256x256xbf16, #tpu.memory_space<vmem>>, vector<256x256xbf16>
    %cst_6 = arith.constant dense<0.000000e+00> : vector<8x256xf32>
    %19 = tpu.matmul %17, %18, %cst_6 {dimension_numbers = #tpu.dot_dimension_numbers<[1], [0], [0], [1], [0, 0, 1, 1], [], []>} : vector<8x256xbf16>, vector<256x256xbf16>, vector<8x256xf32> -> vector<8x256xf32>
    %20 = vector.extract_strided_slice %19 {offsets = [0, 0], sizes = [8, 128], strides = [1, 1]} : vector<8x256xf32> to vector<8x128xf32>
    %21 = vector.broadcast %9 : vector<1x128xf32> to vector<8x128xf32>
    %22 = arith.addf %20, %21 : vector<8x128xf32>
    %cst_7 = arith.constant 2.000000e-01 : f32
    %23 = vector.broadcast %cst_7 : f32 to vector<8x128xf32>
    %24 = arith.mulf %23, %22 : vector<8x128xf32>
    %25 = arith.maximumf %22, %24 : vector<8x128xf32>
    %26 = arith.truncf %25 : vector<8x128xf32> to vector<8x128xbf16>
    %c0_8 = arith.constant 0 : index
    %c0_9 = arith.constant 0 : index
    %27 = vector.load %arg4[%c0_8, %c0_9] : memref<128x128xbf16, #tpu.memory_space<vmem>>, vector<128x128xbf16>
    %cst_10 = arith.constant dense<0.000000e+00> : vector<8x128xf32>
    %28 = tpu.matmul %26, %27, %cst_10 {dimension_numbers = #tpu.dot_dimension_numbers<[1], [0], [0], [1], [0, 0, 1, 1], [], []>} : vector<8x128xbf16>, vector<128x128xbf16>, vector<8x128xf32> -> vector<8x128xf32>
    %29 = vector.extract_strided_slice %19 {offsets = [0, 128], sizes = [8, 128], strides = [1, 1]} : vector<8x256xf32> to vector<8x128xf32>
    %30 = arith.addf %28, %29 : vector<8x128xf32>
    %cst_11 = arith.constant dense<0.000000e+00> : vector<8x128xf32>
    %31 = tpu.matmul %7, %30, %cst_11 {dimension_numbers = #tpu.dot_dimension_numbers<[1], [0], [0], [1], [0, 0, 1, 1], [], []>} : vector<8x8xf32>, vector<8x128xf32>, vector<8x128xf32> -> vector<8x128xf32>
    %32 = vector.extract_strided_slice %31 {offsets = [0, 0], sizes = [1, 128], strides = [1, 1]} : vector<8x128xf32> to vector<1x128xf32>
    %33 = arith.mulf %30, %30 : vector<8x128xf32>
    %cst_12 = arith.constant dense<0.000000e+00> : vector<8x128xf32>
    %34 = tpu.matmul %7, %33, %cst_12 {dimension_numbers = #tpu.dot_dimension_numbers<[1], [0], [0], [1], [0, 0, 1, 1], [], []>} : vector<8x8xf32>, vector<8x128xf32>, vector<8x128xf32> -> vector<8x128xf32>
    %35 = vector.extract_strided_slice %34 {offsets = [0, 0], sizes = [1, 128], strides = [1, 1]} : vector<8x128xf32> to vector<1x128xf32>
    %36 = vector.broadcast %2 : f32 to vector<1x128xf32>
    %37 = arith.mulf %32, %36 : vector<1x128xf32>
    %38 = vector.broadcast %2 : f32 to vector<1x128xf32>
    %39 = arith.mulf %35, %38 : vector<1x128xf32>
    %40 = arith.mulf %37, %37 : vector<1x128xf32>
    %41 = arith.subf %39, %40 : vector<1x128xf32>
    %cst_13 = arith.constant 0.000000e+00 : f32
    %42 = vector.broadcast %cst_13 : f32 to vector<1x128xf32>
    %43 = arith.maximumf %41, %42 : vector<1x128xf32>
    %cst_14 = arith.constant 8.000000e-01 : f32
    %44 = vector.broadcast %cst_14 : f32 to vector<1x128xf32>
    %45 = arith.addf %43, %44 : vector<1x128xf32>
    %46 = math.rsqrt %45 : vector<1x128xf32>
    %47 = arith.mulf %10, %46 : vector<1x128xf32>
    %48 = arith.mulf %37, %47 : vector<1x128xf32>
    %49 = arith.subf %11, %48 : vector<1x128xf32>
    %50 = vector.broadcast %47 : vector<1x128xf32> to vector<8x128xf32>
    %51 = arith.mulf %30, %50 : vector<8x128xf32>
    %52 = vector.broadcast %49 : vector<1x128xf32> to vector<8x128xf32>
    %53 = arith.addf %51, %52 : vector<8x128xf32>
    %cst_15 = arith.constant 2.500000e-01 : f32
    %54 = vector.broadcast %cst_15 : f32 to vector<8x128xf32>
    %55 = arith.mulf %54, %53 : vector<8x128xf32>
    %56 = arith.maximumf %53, %55 : vector<8x128xf32>
    %57 = arith.truncf %56 : vector<8x128xf32> to vector<8x128xbf16>
    %c0_16 = arith.constant 0 : index
    %c0_17 = arith.constant 0 : index
    %58 = vector.load %arg5[%c0_16, %c0_17] : memref<128x256xbf16, #tpu.memory_space<vmem>>, vector<128x256xbf16>
    %cst_18 = arith.constant dense<0.000000e+00> : vector<8x256xf32>
    %59 = tpu.matmul %57, %58, %cst_18 {dimension_numbers = #tpu.dot_dimension_numbers<[1], [0], [0], [1], [0, 0, 1, 1], [], []>} : vector<8x128xbf16>, vector<128x256xbf16>, vector<8x256xf32> -> vector<8x256xf32>
    %cst_19 = arith.constant dense<0.000000e+00> : vector<8x256xf32>
    %60 = tpu.matmul %7, %59, %cst_19 {dimension_numbers = #tpu.dot_dimension_numbers<[1], [0], [0], [1], [0, 0, 1, 1], [], []>} : vector<8x8xf32>, vector<8x256xf32>, vector<8x256xf32> -> vector<8x256xf32>
    %61 = vector.extract_strided_slice %60 {offsets = [0, 0], sizes = [1, 256], strides = [1, 1]} : vector<8x256xf32> to vector<1x256xf32>
    %62 = arith.mulf %59, %59 : vector<8x256xf32>
    %cst_20 = arith.constant dense<0.000000e+00> : vector<8x256xf32>
    %63 = tpu.matmul %7, %62, %cst_20 {dimension_numbers = #tpu.dot_dimension_numbers<[1], [0], [0], [1], [0, 0, 1, 1], [], []>} : vector<8x8xf32>, vector<8x256xf32>, vector<8x256xf32> -> vector<8x256xf32>
    %64 = vector.extract_strided_slice %63 {offsets = [0, 0], sizes = [1, 256], strides = [1, 1]} : vector<8x256xf32> to vector<1x256xf32>
    %65 = vector.broadcast %2 : f32 to vector<1x256xf32>
    %66 = arith.mulf %61, %65 : vector<1x256xf32>
    %67 = vector.broadcast %2 : f32 to vector<1x256xf32>
    %68 = arith.mulf %64, %67 : vector<1x256xf32>
    %69 = arith.mulf %66, %66 : vector<1x256xf32>
    %70 = arith.subf %68, %69 : vector<1x256xf32>
    %cst_21 = arith.constant 0.000000e+00 : f32
    %71 = vector.broadcast %cst_21 : f32 to vector<1x256xf32>
    %72 = arith.maximumf %70, %71 : vector<1x256xf32>
    %cst_22 = arith.constant 8.000000e-01 : f32
    %73 = vector.broadcast %cst_22 : f32 to vector<1x256xf32>
    %74 = arith.addf %72, %73 : vector<1x256xf32>
    %75 = math.rsqrt %74 : vector<1x256xf32>
    %76 = arith.mulf %12, %75 : vector<1x256xf32>
    %77 = arith.mulf %66, %76 : vector<1x256xf32>
    %78 = arith.subf %13, %77 : vector<1x256xf32>
    %79 = vector.broadcast %76 : vector<1x256xf32> to vector<8x256xf32>
    %80 = arith.mulf %59, %79 : vector<8x256xf32>
    %81 = vector.broadcast %78 : vector<1x256xf32> to vector<8x256xf32>
    %82 = arith.addf %80, %81 : vector<8x256xf32>
    %cst_23 = arith.constant 2.500000e-01 : f32
    %83 = vector.broadcast %cst_23 : f32 to vector<8x256xf32>
    %84 = arith.mulf %83, %82 : vector<8x256xf32>
    %85 = arith.maximumf %82, %84 : vector<8x256xf32>
    %86 = arith.truncf %85 : vector<8x256xf32> to vector<8x256xbf16>
    %c0_24 = arith.constant 0 : index
    %c0_25 = arith.constant 0 : index
    %87 = vector.load %arg6[%c0_24, %c0_25] : memref<256x512xbf16, #tpu.memory_space<vmem>>, vector<256x512xbf16>
    %cst_26 = arith.constant dense<0.000000e+00> : vector<8x512xf32>
    %88 = tpu.matmul %86, %87, %cst_26 {dimension_numbers = #tpu.dot_dimension_numbers<[1], [0], [0], [1], [0, 0, 1, 1], [], []>} : vector<8x256xbf16>, vector<256x512xbf16>, vector<8x512xf32> -> vector<8x512xf32>
    %cst_27 = arith.constant dense<0.000000e+00> : vector<8x512xf32>
    %89 = tpu.matmul %7, %88, %cst_27 {dimension_numbers = #tpu.dot_dimension_numbers<[1], [0], [0], [1], [0, 0, 1, 1], [], []>} : vector<8x8xf32>, vector<8x512xf32>, vector<8x512xf32> -> vector<8x512xf32>
    %90 = vector.extract_strided_slice %89 {offsets = [0, 0], sizes = [1, 512], strides = [1, 1]} : vector<8x512xf32> to vector<1x512xf32>
    %91 = arith.mulf %88, %88 : vector<8x512xf32>
    %cst_28 = arith.constant dense<0.000000e+00> : vector<8x512xf32>
    %92 = tpu.matmul %7, %91, %cst_28 {dimension_numbers = #tpu.dot_dimension_numbers<[1], [0], [0], [1], [0, 0, 1, 1], [], []>} : vector<8x8xf32>, vector<8x512xf32>, vector<8x512xf32> -> vector<8x512xf32>
    %93 = vector.extract_strided_slice %92 {offsets = [0, 0], sizes = [1, 512], strides = [1, 1]} : vector<8x512xf32> to vector<1x512xf32>
    %94 = vector.broadcast %2 : f32 to vector<1x512xf32>
    %95 = arith.mulf %90, %94 : vector<1x512xf32>
    %96 = vector.broadcast %2 : f32 to vector<1x512xf32>
    %97 = arith.mulf %93, %96 : vector<1x512xf32>
    %98 = arith.mulf %95, %95 : vector<1x512xf32>
    %99 = arith.subf %97, %98 : vector<1x512xf32>
    %cst_29 = arith.constant 0.000000e+00 : f32
    %100 = vector.broadcast %cst_29 : f32 to vector<1x512xf32>
    %101 = arith.maximumf %99, %100 : vector<1x512xf32>
    %cst_30 = arith.constant 8.000000e-01 : f32
    %102 = vector.broadcast %cst_30 : f32 to vector<1x512xf32>
    %103 = arith.addf %101, %102 : vector<1x512xf32>
    %104 = math.rsqrt %103 : vector<1x512xf32>
    %105 = arith.mulf %14, %104 : vector<1x512xf32>
    %106 = arith.mulf %95, %105 : vector<1x512xf32>
    %107 = arith.subf %15, %106 : vector<1x512xf32>
    %108 = vector.broadcast %105 : vector<1x512xf32> to vector<8x512xf32>
    %109 = arith.mulf %88, %108 : vector<8x512xf32>
    %110 = vector.broadcast %107 : vector<1x512xf32> to vector<8x512xf32>
    %111 = arith.addf %109, %110 : vector<8x512xf32>
    %cst_31 = arith.constant 2.500000e-01 : f32
    %112 = vector.broadcast %cst_31 : f32 to vector<8x512xf32>
    %113 = arith.mulf %112, %111 : vector<8x512xf32>
    %114 = arith.maximumf %111, %113 : vector<8x512xf32>
    %115 = arith.truncf %114 : vector<8x512xf32> to vector<8x512xbf16>
    %c0_32 = arith.constant 0 : index
    %c0_33 = arith.constant 0 : index
    %116 = vector.load %arg7[%c0_32, %c0_33] : memref<512x128xbf16, #tpu.memory_space<vmem>>, vector<512x128xbf16>
    %cst_34 = arith.constant dense<0.000000e+00> : vector<8x128xf32>
    %117 = tpu.matmul %115, %116, %cst_34 {dimension_numbers = #tpu.dot_dimension_numbers<[1], [0], [0], [1], [0, 0, 1, 1], [], []>} : vector<8x512xbf16>, vector<512x128xbf16>, vector<8x128xf32> -> vector<8x128xf32>
    %118 = math.tanh %117 : vector<8x128xf32>
    %c0_35 = arith.constant 0 : index
    %c0_36 = arith.constant 0 : index
    %119 = vector.load %arg8[%c0_35, %c0_36] : memref<8x128xf32, #tpu.memory_space<vmem>>, vector<8x128xf32>
    tpu.vector_store %arg8[%c0_35, %c0_36], %118 {strides = array<i32>} : memref<8x128xf32, #tpu.memory_space<vmem>>, vector<8x128xf32>,
    return
  }
}

</mosaic_0001>

<llo_original>
// kernel: limb_length_generator_forward.1
$region0: #{limb_length_generator_forward.1}
  #allocation0 [shape = 'u32[]', space=smem, size = 0x4, offset = 0x4, fixed_abs, tag = 'smem constant byte address 0x4 - core index']
  #allocation1 [shape = 'u32[144,128]{1,0:T(1,128)}', space=vmem, size = 0x12000, scoped, tag = 'internal scratch']
  #allocation2 [shape = 's32[1]{0:T(128)S(6)}', space=smem, size = 0x200, scoped, tag = 'scoped memory for limb_length_generator_forward.1']
  %s0 = inlined_call_operand.<no memory space> [shape: s32[1], index: 0, kind: input, shape index: {}]
  %s1 = inlined_call_operand.vmem [shape: f32[8,256], index: 1, kind: input, shape index: {}]
  %s2 = inlined_call_operand.vmem [shape: f32[8,512], index: 2, kind: input, shape index: {}]
  %s3 = inlined_call_operand.hbm [shape: bf16[256,256], index: 3, kind: input, shape index: {}]
  %s4 = inlined_call_operand.vmem [shape: bf16[128,128], index: 4, kind: input, shape index: {}]
  %s5 = inlined_call_operand.hbm [shape: bf16[128,256], index: 5, kind: input, shape index: {}]
  %s6 = inlined_call_operand.hbm [shape: bf16[256,512], index: 6, kind: input, shape index: {}]
  %s7 = inlined_call_operand.hbm [shape: bf16[512,128], index: 7, kind: input, shape index: {}]
  %s8 = inlined_call_operand.vmem [shape: f32[8,128], index: 8, kind: output, shape index: {}]
  %s9 = sld [smem:[#allocation0]]
  $region58: #{limb_length_generator_forward.1} parent=0
    _
  %s11 = ssub.s32 1, %s9
  %s12 = scalar_select 0, %s11, %s9
  %13 = sst [smem:[#allocation2]] %s0
  $region1: #{limb_length_generator_forward.1} parent=0
    #allocation3 [shape = 'u8[131072]{0}', space=vmem, size = 0x20000, scoped, tag = 'input window, operand 3, single buffered']
    #allocation4 [shape = 's32[1]{0}', space=sflag, size = 0x4, scoped, tag = 'scoped memory for limb_length_generator_forward.1']
    #allocation5 [shape = 'u8[65536]{0}', space=vmem, size = 0x10000, scoped, tag = 'input window, operand 5, single buffered']
    #allocation6 [shape = 's32[1]{0}', space=sflag, size = 0x4, scoped, tag = 'scoped memory for limb_length_generator_forward.1']
    #allocation7 [shape = 'u8[262144]{0}', space=vmem, size = 0x40000, scoped, tag = 'input window, operand 6, single buffered']
    #allocation8 [shape = 'u8[131072]{0}', space=vmem, size = 0x20000, scoped, tag = 'input window, operand 7, single buffered']
    #allocation9 [shape = 's32[1]{0}', space=sflag, size = 0x4, scoped, tag = 'scoped memory for limb_length_generator_forward.1']
    %14 = vsyncpa [#allocation4], 0
    %15 = vsyncpa [#allocation6], 0
    %16 = vsyncpa [#allocation9], 0
    // Predicated region
    $region2: #{limb_length_generator_forward.1} parent=1 // pred_check
      _
    $region3: #{limb_length_generator_forward.1} parent=1 // pred_check_branch
      %18 = sbr.rel (0) target = $region5
    $region4: #{limb_length_generator_forward.1} parent=1 // pred_region
      _
    $region5: #{limb_length_generator_forward.1} parent=1 // pred_fallthru
      _
    // Predicated region
    $region6: #{limb_length_generator_forward.1} parent=1 // pred_check
      _
    $region7: #{limb_length_generator_forward.1} parent=1 // pred_check_branch
      %20 = sbr.rel (0) target = $region9
    $region8: #{limb_length_generator_forward.1} parent=1 // pred_region
      _
    $region9: #{limb_length_generator_forward.1} parent=1 // pred_fallthru
      _
    // Predicated region
    $region10: #{limb_length_generator_forward.1} parent=1 // pred_check
      _
    $region11: #{limb_length_generator_forward.1} parent=1 // pred_check_branch
      %22 = sbr.rel (0) target = $region13
    $region12: #{limb_length_generator_forward.1} parent=1 // pred_region
      _
    $region13: #{limb_length_generator_forward.1} parent=1 // pred_fallthru
      _
    // Predicated region
    $region14: #{limb_length_generator_forward.1} parent=1 // pred_check
      _
    $region15: #{limb_length_generator_forward.1} parent=1 // pred_check_branch
      %24 = sbr.rel (0) target = $region17
    $region16: #{limb_length_generator_forward.1} parent=1 // pred_region
      %s26 = ssub.s32 4096, 4096
      %27 = vsyncadd [#allocation4], %s26
      %s28 = sshll.u32 [#allocation3], 4
      %s29 = int_to_ptr.vmem [resolvable:$true] %s28
      %34 = dma.hbm_to_vmem [thread:$0]  %s3, 4096, %s29, [#allocation4], 128, 128, 8
    $region17: #{limb_length_generator_forward.1} parent=1 // pred_fallthru
      _
    // Predicated region
    $region18: #{limb_length_generator_forward.1} parent=1 // pred_check
      _
    $region19: #{limb_length_generator_forward.1} parent=1 // pred_check_branch
      %36 = sbr.rel (0) target = $region21
    $region20: #{limb_length_generator_forward.1} parent=1 // pred_region
      _
    $region21: #{limb_length_generator_forward.1} parent=1 // pred_fallthru
      _
    // Predicated region
    $region22: #{limb_length_generator_forward.1} parent=1 // pred_check
      _
    $region23: #{limb_length_generator_forward.1} parent=1 // pred_check_branch
      %38 = sbr.rel (0) target = $region25
    $region24: #{limb_length_generator_forward.1} parent=1 // pred_region
      %s40 = ssub.s32 2048, 2048
      %41 = vsyncadd [#allocation6], %s40
      %s42 = sshll.u32 [#allocation5], 4
      %s43 = int_to_ptr.vmem [resolvable:$true] %s42
      %48 = dma.hbm_to_vmem [thread:$0]  %s5, 2048, %s43, [#allocation6], 128, 128, 8
    $region25: #{limb_length_generator_forward.1} parent=1 // pred_fallthru
      _
    // Predicated region
    $region26: #{limb_length_generator_forward.1} parent=1 // pred_check
      _
    $region27: #{limb_length_generator_forward.1} parent=1 // pred_check_branch
      %50 = sbr.rel (0) target = $region29
    $region28: #{limb_length_generator_forward.1} parent=1 // pred_region
      %s52 = ssub.s32 8192, 8192
      %53 = vsyncadd [#allocation6], %s52
      %s54 = sshll.u32 [#allocation7], 4
      %s55 = int_to_ptr.vmem [resolvable:$true] %s54
      %60 = dma.hbm_to_vmem [thread:$0]  %s6, 8192, %s55, [#allocation6], 256, 256, 16
    $region29: #{limb_length_generator_forward.1} parent=1 // pred_fallthru
      _
    // Predicated region
    $region30: #{limb_length_generator_forward.1} parent=1 // pred_check
      _
    $region31: #{limb_length_generator_forward.1} parent=1 // pred_check_branch
      %62 = sbr.rel (0) target = $region33
    $region32: #{limb_length_generator_forward.1} parent=1 // pred_region
      %s64 = ssub.s32 4096, 4096
      %65 = vsyncadd [#allocation9], %s64
      %s66 = sshll.u32 [#allocation8], 4
      %s67 = int_to_ptr.vmem [resolvable:$true] %s66
      %72 = dma.hbm_to_vmem [thread:$0]  %s7, 4096, %s67, [#allocation9], 64, 64, 4
    $region33: #{limb_length_generator_forward.1} parent=1 // pred_fallthru
      _
    // Predicated region
    $region34: #{limb_length_generator_forward.1} parent=1 // pred_check
      _
    $region35: #{limb_length_generator_forward.1} parent=1 // pred_check_branch
      %74 = sbr.rel (0) target = $region37
    $region36: #{limb_length_generator_forward.1} parent=1 // pred_region
      %75 = dma.done [#allocation4], 4096
    $region37: #{limb_length_generator_forward.1} parent=1 // pred_fallthru
      _
    // Predicated region
    $region38: #{limb_length_generator_forward.1} parent=1 // pred_check
      _
    $region39: #{limb_length_generator_forward.1} parent=1 // pred_check_branch
      %77 = sbr.rel (0) target = $region41
    $region40: #{limb_length_generator_forward.1} parent=1 // pred_region
      %78 = dma.done [#allocation6], 2048
    $region41: #{limb_length_generator_forward.1} parent=1 // pred_fallthru
      _
    // Predicated region
    $region42: #{limb_length_generator_forward.1} parent=1 // pred_check
      _
    $region43: #{limb_length_generator_forward.1} parent=1 // pred_check_branch
      %80 = sbr.rel (0) target = $region45
    $region44: #{limb_length_generator_forward.1} parent=1 // pred_region
      %81 = dma.done [#allocation6], 8192
    $region45: #{limb_length_generator_forward.1} parent=1 // pred_fallthru
      _
    // Predicated region
    $region46: #{limb_length_generator_forward.1} parent=1 // pred_check
      _
    $region47: #{limb_length_generator_forward.1} parent=1 // pred_check_branch
      %83 = sbr.rel (0) target = $region49
    $region48: #{limb_length_generator_forward.1} parent=1 // pred_region
      %84 = dma.done [#allocation9], 4096
    $region49: #{limb_length_generator_forward.1} parent=1 // pred_fallthru
      _
    %s86 = sld [smem:[#allocation2]]
    %s87 = scvt.s32.f32 %s86
    %v88 = vstv %s87
    %v89 = vrcp.pop %v88
    %s90 = vtos %v89
    %v91 = vlaneseq
    %v92 = vand.u32 %v91, 127
    %v93 = vstv %s86
    %vm94 = vcmp.lt.s32.totalorder %v92, %v93
    %v95 = vsel %vm94, 1, 0
    %v96 = vcvt.s32.f32 %v95
    %v97 = vld [vmem:[%s2] sm:$0xff]
    %v98 = vld [vmem:[%s2 + $0x8] sm:$0xff]
    %v99 = vld [vmem:[%s2 + $0x10] sm:$0xff]
    %v100 = vld [vmem:[%s2 + $0x18] sm:$0xff]
    %v101 = vld [vmem:[%s1] sm:$0xff]
    %v102 = vld [vmem:[%s1 + $0x8] sm:$0xff]
    %v103 = vpack.c.bf16 %v101, %v101
    %v104 = vpack.c.bf16 %v102, %v102
    %v105 = vld [vmem:[#allocation3] sm:$0xff]
    %v106 = vld [vmem:[#allocation3 + $0x8] sm:$0xff]
    %v107 = vld [vmem:[#allocation3 + $0x10] sm:$0xff]
    %v108 = vld [vmem:[#allocation3 + $0x18] sm:$0xff]
    %v109 = vld [vmem:[#allocation3 + $0x20] sm:$0xff]
    %v110 = vld [vmem:[#allocation3 + $0x28] sm:$0xff]
    %v111 = vld [vmem:[#allocation3 + $0x30] sm:$0xff]
    %v112 = vld [vmem:[#allocation3 + $0x38] sm:$0xff]
    %v113 = vld [vmem:[#allocation3 + $0x40] sm:$0xff]
    %v114 = vld [vmem:[#allocation3 + $0x48] sm:$0xff]
    %v115 = vld [vmem:[#allocation3 + $0x50] sm:$0xff]
    %v116 = vld [vmem:[#allocation3 + $0x58] sm:$0xff]
    %v117 = vld [vmem:[#allocation3 + $0x60] sm:$0xff]
    %v118 = vld [vmem:[#allocation3 + $0x68] sm:$0xff]
    %v119 = vld [vmem:[#allocation3 + $0x70] sm:$0xff]
    %v120 = vld [vmem:[#allocation3 + $0x78] sm:$0xff]
    %v121 = vld [vmem:[#allocation3 + $0x80] sm:$0xff]
    %v122 = vld [vmem:[#allocation3 + $0x88] sm:$0xff]
    %v123 = vld [vmem:[#allocation3 + $0x90] sm:$0xff]
    %v124 = vld [vmem:[#allocation3 + $0x98] sm:$0xff]
    %v125 = vld [vmem:[#allocation3 + $0xa0] sm:$0xff]
    %v126 = vld [vmem:[#allocation3 + $0xa8] sm:$0xff]
    %v127 = vld [vmem:[#allocation3 + $0xb0] sm:$0xff]
    %v128 = vld [vmem:[#allocation3 + $0xb8] sm:$0xff]
    %v129 = vld [vmem:[#allocation3 + $0xc0] sm:$0xff]
    %v130 = vld [vmem:[#allocation3 + $0xc8] sm:$0xff]
    %v131 = vld [vmem:[#allocation3 + $0xd0] sm:$0xff]
    %v132 = vld [vmem:[#allocation3 + $0xd8] sm:$0xff]
    %v133 = vld [vmem:[#allocation3 + $0xe0] sm:$0xff]
    %v134 = vld [vmem:[#allocation3 + $0xe8] sm:$0xff]
    %v135 = vld [vmem:[#allocation3 + $0xf0] sm:$0xff]
    %v136 = vld [vmem:[#allocation3 + $0xf8] sm:$0xff]
    %v169 = vunpack.c.l.b16 %v105
    %v170 = vunpack.c.h.b16 %v105
    %v171 = vunpack.c.l.b16 %v106
    %v172 = vunpack.c.h.b16 %v106
    %v173 = vunpack.c.l.b16 %v107
    %v174 = vunpack.c.h.b16 %v107
    %v175 = vunpack.c.l.b16 %v108
    %v176 = vunpack.c.h.b16 %v108
    %v177 = vunpack.c.l.b16 %v109
    %v178 = vunpack.c.h.b16 %v109
    %v179 = vunpack.c.l.b16 %v110
    %v180 = vunpack.c.h.b16 %v110
    %v181 = vunpack.c.l.b16 %v111
    %v182 = vunpack.c.h.b16 %v111
    %v183 = vunpack.c.l.b16 %v112
    %v184 = vunpack.c.h.b16 %v112
    %v185 = vunpack.c.l.b16 %v113
    %v186 = vunpack.c.h.b16 %v113
    %v187 = vunpack.c.l.b16 %v114
    %v188 = vunpack.c.h.b16 %v114
    %v189 = vunpack.c.l.b16 %v115
    %v190 = vunpack.c.h.b16 %v115
    %v191 = vunpack.c.l.b16 %v116
    %v192 = vunpack.c.h.b16 %v116
    %v193 = vunpack.c.l.b16 %v117
    %v194 = vunpack.c.h.b16 %v117
    %v195 = vunpack.c.l.b16 %v118
    %v196 = vunpack.c.h.b16 %v118
    %v197 = vunpack.c.l.b16 %v119
    %v198 = vunpack.c.h.b16 %v119
    %v199 = vunpack.c.l.b16 %v120
    %v200 = vunpack.c.h.b16 %v120
    %v201 = vunpack.c.l.b16 %v121
    %v202 = vunpack.c.h.b16 %v121
    %v203 = vunpack.c.l.b16 %v122
    %v204 = vunpack.c.h.b16 %v122
    %v205 = vunpack.c.l.b16 %v123
    %v206 = vunpack.c.h.b16 %v123
    %v207 = vunpack.c.l.b16 %v124
    %v208 = vunpack.c.h.b16 %v124
    %v209 = vunpack.c.l.b16 %v125
    %v210 = vunpack.c.h.b16 %v125
    %v211 = vunpack.c.l.b16 %v126
    %v212 = vunpack.c.h.b16 %v126
    %v213 = vunpack.c.l.b16 %v127
    %v214 = vunpack.c.h.b16 %v127
    %v215 = vunpack.c.l.b16 %v128
    %v216 = vunpack.c.h.b16 %v128
    %v217 = vunpack.c.l.b16 %v129
    %v218 = vunpack.c.h.b16 %v129
    %v219 = vunpack.c.l.b16 %v130
    %v220 = vunpack.c.h.b16 %v130
    %v221 = vunpack.c.l.b16 %v131
    %v222 = vunpack.c.h.b16 %v131
    %v223 = vunpack.c.l.b16 %v132
    %v224 = vunpack.c.h.b16 %v132
    %v225 = vunpack.c.l.b16 %v133
    %v226 = vunpack.c.h.b16 %v133
    %v227 = vunpack.c.l.b16 %v134
    %v228 = vunpack.c.h.b16 %v134
    %v229 = vunpack.c.l.b16 %v135
    %v230 = vunpack.c.h.b16 %v135
    %v231 = vunpack.c.l.b16 %v136
    %v232 = vunpack.c.h.b16 %v136
    %v233 = vpack.c.b16 %v171, %v169
    %v234 = vpack.c.b16 %v172, %v170
    %v235 = vpack.c.b16 %v175, %v173
    %v236 = vpack.c.b16 %v176, %v174
    %v237 = vpack.c.b16 %v179, %v177
    %v238 = vpack.c.b16 %v180, %v178
    %v239 = vpack.c.b16 %v183, %v181
    %v240 = vpack.c.b16 %v184, %v182
    %v241 = vpack.c.b16 %v187, %v185
    %v242 = vpack.c.b16 %v188, %v186
    %v243 = vpack.c.b16 %v191, %v189
    %v244 = vpack.c.b16 %v192, %v190
    %v245 = vpack.c.b16 %v195, %v193
    %v246 = vpack.c.b16 %v196, %v194
    %v247 = vpack.c.b16 %v199, %v197
    %v248 = vpack.c.b16 %v200, %v198
    %v249 = vpack.c.b16 %v203, %v201
    %v250 = vpack.c.b16 %v204, %v202
    %v251 = vpack.c.b16 %v207, %v205
    %v252 = vpack.c.b16 %v208, %v206
    %v253 = vpack.c.b16 %v211, %v209
    %v254 = vpack.c.b16 %v212, %v210
    %v255 = vpack.c.b16 %v215, %v213
    %v256 = vpack.c.b16 %v216, %v214
    %v257 = vpack.c.b16 %v219, %v217
    %v258 = vpack.c.b16 %v220, %v218
    %v259 = vpack.c.b16 %v223, %v221
    %v260 = vpack.c.b16 %v224, %v222
    %v261 = vpack.c.b16 %v227, %v225
    %v262 = vpack.c.b16 %v228, %v226
    %v263 = vpack.c.b16 %v231, %v229
    %v264 = vpack.c.b16 %v232, %v230
    %297 = vmatprep.subr.bf16.mxu0 %v234
    %298 = vmatpush1.bf16.msra.mxu0 %v233
    %299 = vmatprep.subr.bf16.mxu0 %v236
    %300 = vmatpush1.bf16.msra.mxu0 %v235
    %301 = vmatprep.subr.bf16.mxu0 %v238
    %302 = vmatpush1.bf16.msra.mxu0 %v237
    %303 = vmatprep.subr.bf16.mxu0 %v240
    %304 = vmatpush1.bf16.msra.mxu0 %v239
    %305 = vmatprep.subr.bf16.mxu0 %v242
    %306 = vmatpush1.bf16.msra.mxu0 %v241
    %307 = vmatprep.subr.bf16.mxu0 %v244
    %308 = vmatpush1.bf16.msra.mxu0 %v243
    %309 = vmatprep.subr.bf16.mxu0 %v246
    %310 = vmatpush1.bf16.msra.mxu0 %v245
    %311 = vmatprep.subr.bf16.mxu0 %v248
    %312 = vmatpush1.bf16.msra.mxu0 %v247
    %313 = vmatprep.subr.bf16.mxu0 %v250
    %314 = vmatpush1.bf16.msra.mxu0 %v249
    %315 = vmatprep.subr.bf16.mxu0 %v252
    %316 = vmatpush1.bf16.msra.mxu0 %v251
    %317 = vmatprep.subr.bf16.mxu0 %v254
    %318 = vmatpush1.bf16.msra.mxu0 %v253
    %319 = vmatprep.subr.bf16.mxu0 %v256
    %320 = vmatpush1.bf16.msra.mxu0 %v255
    %321 = vmatprep.subr.bf16.mxu0 %v258
    %322 = vmatpush1.bf16.msra.mxu0 %v257
    %323 = vmatprep.subr.bf16.mxu0 %v260
    %324 = vmatpush1.bf16.msra.mxu0 %v259
    %325 = vmatprep.subr.bf16.mxu0 %v262
    %326 = vmatpush1.bf16.msra.mxu0 %v261
    %327 = vmatprep.subr.bf16.mxu0 %v264
    %328 = vmatpush1.bf16.msra.mxu0 %v263
    %329 = vmatprep.mubr.bf16.mxu0 %v104
    %330 = vmatmul.mubr.bf16.gmra.mrb[0].mxu0 %v103
    %v331 = vpop.f32.mrb[0].mxu0
    %v332 = vadd.f32 0.0, %v331
    %v333 = vpop.f32.mrb[0].mxu0
    %v334 = vadd.f32 0.0, %v333
    %v335 = vpop.f32.mrb[0].mxu0
    %v336 = vpop.f32.mrb[0].mxu0
    %337 = vdwg.mxu0
    %v338 = vlaneseq
    %v339 = vshrl.u32 %v338, 7
    %v340 = vsub.s32 0, %v339
    %v341 = vrot.slane %v97, %v340
    %v342 = vadd.f32 %v332, %v341
    %v343 = vmul.f32 %v342, 0.2
    %v344 = vmax.f32 %v342, %v343
    %v345 = vpack.c.bf16 %v344, %v344
    %v346 = vld [vmem:[%s4] sm:$0xf]
    %v347 = vld [vmem:[%s4 + $0x4] sm:$0xf]
    %v348 = vld [vmem:[%s4 + $0x8] sm:$0xf]
    %v349 = vld [vmem:[%s4 + $0xc] sm:$0xf]
    %v350 = vld [vmem:[%s4 + $0x10] sm:$0xf]
    %v351 = vld [vmem:[%s4 + $0x14] sm:$0xf]
    %v352 = vld [vmem:[%s4 + $0x18] sm:$0xf]
    %v353 = vld [vmem:[%s4 + $0x1c] sm:$0xf]
    %v354 = vld [vmem:[%s4 + $0x20] sm:$0xf]
    %v355 = vld [vmem:[%s4 + $0x24] sm:$0xf]
    %v356 = vld [vmem:[%s4 + $0x28] sm:$0xf]
    %v357 = vld [vmem:[%s4 + $0x2c] sm:$0xf]
    %v358 = vld [vmem:[%s4 + $0x30] sm:$0xf]
    %v359 = vld [vmem:[%s4 + $0x34] sm:$0xf]
    %v360 = vld [vmem:[%s4 + $0x38] sm:$0xf]
    %v361 = vld [vmem:[%s4 + $0x3c] sm:$0xf]
    %v378 = vunpack.c.l.b16 %v346
    %v379 = vunpack.c.l.b16 %v347
    %v380 = vunpack.c.l.b16 %v348
    %v381 = vunpack.c.l.b16 %v349
    %v382 = vunpack.c.l.b16 %v350
    %v383 = vunpack.c.l.b16 %v351
    %v384 = vunpack.c.l.b16 %v352
    %v385 = vunpack.c.l.b16 %v353
    %v386 = vunpack.c.l.b16 %v354
    %v387 = vunpack.c.l.b16 %v355
    %v388 = vunpack.c.l.b16 %v356
    %v389 = vunpack.c.l.b16 %v357
    %v390 = vunpack.c.l.b16 %v358
    %v391 = vunpack.c.l.b16 %v359
    %v392 = vunpack.c.l.b16 %v360
    %v393 = vunpack.c.l.b16 %v361
    %v394 = vpack.c.b16 %v379, %v378
    %v395 = vpack.c.b16 %v381, %v380
    %v396 = vpack.c.b16 %v383, %v382
    %v397 = vpack.c.b16 %v385, %v384
    %v398 = vpack.c.b16 %v387, %v386
    %v399 = vpack.c.b16 %v389, %v388
    %v400 = vpack.c.b16 %v391, %v390
    %v401 = vpack.c.b16 %v393, %v392
    %410 = vmatprep.subr.bf16.mxu0 0
    %411 = vmatpush1.bf16.msra.mxu0 %v394
    %412 = vmatprep.subr.bf16.mxu0 0
    %413 = vmatpush1.bf16.msra.mxu0 %v395
    %414 = vmatprep.subr.bf16.mxu0 0
    %415 = vmatpush1.bf16.msra.mxu0 %v396
    %416 = vmatprep.subr.bf16.mxu0 0
    %417 = vmatpush1.bf16.msra.mxu0 %v397
    %418 = vmatprep.subr.bf16.mxu0 0
    %419 = vmatpush1.bf16.msra.mxu0 %v398
    %420 = vmatprep.subr.bf16.mxu0 0
    %421 = vmatpush1.bf16.msra.mxu0 %v399
    %422 = vmatprep.subr.bf16.mxu0 0
    %423 = vmatpush1.bf16.msra.mxu0 %v400
    %424 = vmatprep.subr.bf16.mxu0 0
    %425 = vmatpush1.bf16.msra.mxu0 %v401
    %426 = vmatprep.subr.bf16.mxu0 0
    %427 = vmatpush1.bf16.msra.mxu0 0
    %428 = vmatprep.subr.bf16.mxu0 0
    %429 = vmatpush1.bf16.msra.mxu0 0
    %430 = vmatprep.subr.bf16.mxu0 0
    %431 = vmatpush1.bf16.msra.mxu0 0
    %432 = vmatprep.subr.bf16.mxu0 0
    %433 = vmatpush1.bf16.msra.mxu0 0
    %434 = vmatprep.subr.bf16.mxu0 0
    %435 = vmatpush1.bf16.msra.mxu0 0
    %436 = vmatprep.subr.bf16.mxu0 0
    %437 = vmatpush1.bf16.msra.mxu0 0
    %438 = vmatprep.subr.bf16.mxu0 0
    %439 = vmatpush1.bf16.msra.mxu0 0
    %440 = vmatprep.subr.bf16.mxu0 0
    %441 = vmatpush1.bf16.msra.mxu0 0
    %442 = vmatprep.mubr.bf16.mxu0 0
    %443 = vmatmul.mubr.bf16.gmra.mrb[0].mxu0 %v345
    %v444 = vpop.f32.mrb[0].mxu0
    %v445 = vadd.f32 %v334, %v444
    %v446 = vpop.f32.mrb[0].mxu0
    %v447 = vpop.f32.mrb[0].mxu0
    %v448 = vpop.f32.mrb[0].mxu0
    %449 = vdwg.mxu0
    %vm450 = vcmask 64512
    %v452 = vsel %vm450, %v96, 0
    %454 = vmatprep.subr.mxu0 0.0
    %455 = vmatpush1.msra.mxu0 %v445
    %456 = vmatprep.subr.mxu0 0.0
    %457 = vmatpush1.msra.mxu0 0.0
    %458 = vmatprep.subr.mxu0 0.0
    %459 = vmatpush1.msra.mxu0 0.0
    %460 = vmatprep.subr.mxu0 0.0
    %461 = vmatpush1.msra.mxu0 0.0
    %462 = vmatprep.subr.mxu0 0.0
    %463 = vmatpush1.msra.mxu0 0.0
    %464 = vmatprep.subr.mxu0 0.0
    %465 = vmatpush1.msra.mxu0 0.0
    %466 = vmatprep.subr.mxu0 0.0
    %467 = vmatpush1.msra.mxu0 0.0
    %468 = vmatprep.subr.mxu0 0.0
    %469 = vmatpush1.msra.mxu0 0.0
    %470 = vmatprep.subr.mxu0 0.0
    %471 = vmatpush1.msra.mxu0 0.0
    %472 = vmatprep.subr.mxu0 0.0
    %473 = vmatpush1.msra.mxu0 0.0
    %474 = vmatprep.subr.mxu0 0.0
    %475 = vmatpush1.msra.mxu0 0.0
    %476 = vmatprep.subr.mxu0 0.0
    %477 = vmatpush1.msra.mxu0 0.0
    %478 = vmatprep.subr.mxu0 0.0
    %479 = vmatpush1.msra.mxu0 0.0
    %480 = vmatprep.subr.mxu0 0.0
    %481 = vmatpush1.msra.mxu0 0.0
    %482 = vmatprep.subr.mxu0 0.0
    %483 = vmatpush1.msra.mxu0 0.0
    %484 = vmatprep.subr.mxu0 0.0
    %485 = vmatpush1.msra.mxu0 0.0
    %486 = vmatprep.subr.mxu0 0.0
    %487 = vmatpush1.msra.mxu0 0.0
    %488 = vmatprep.subr.mxu0 0.0
    %489 = vmatpush1.msra.mxu0 0.0
    %490 = vmatprep.subr.mxu0 0.0
    %491 = vmatpush1.msra.mxu0 0.0
    %492 = vmatprep.subr.mxu0 0.0
    %493 = vmatpush1.msra.mxu0 0.0
    %494 = vmatprep.subr.mxu0 0.0
    %495 = vmatpush1.msra.mxu0 0.0
    %496 = vmatprep.subr.mxu0 0.0
    %497 = vmatpush1.msra.mxu0 0.0
    %498 = vmatprep.subr.mxu0 0.0
    %499 = vmatpush1.msra.mxu0 0.0
    %500 = vmatprep.subr.mxu0 0.0
    %501 = vmatpush1.msra.mxu0 0.0
    %502 = vmatprep.subr.mxu0 0.0
    %503 = vmatpush1.msra.mxu0 0.0
    %504 = vmatprep.subr.mxu0 0.0
    %505 = vmatpush1.msra.mxu0 0.0
    %506 = vmatprep.subr.mxu0 0.0
    %507 = vmatpush1.msra.mxu0 0.0
    %508 = vmatprep.subr.mxu0 0.0
    %509 = vmatpush1.msra.mxu0 0.0
    %510 = vmatprep.subr.mxu0 0.0
    %511 = vmatpush1.msra.mxu0 0.0
    %512 = vmatprep.subr.mxu0 0.0
    %513 = vmatpush1.msra.mxu0 0.0
    %514 = vmatprep.subr.mxu0 0.0
    %515 = vmatpush1.msra.mxu0 0.0
    %516 = vmatprep.subr.mxu0 0.0
    %517 = vmatpush1.msra.mxu0 0.0
    %518 = vmatprep.mubr.f32.mxu0 0.0
    %519 = vmatmul.mubr.f32.gmra.mrb[0].mxu0 %v452
    %v520 = vpop.f32.mrb[0].mxu0
    %v521 = vadd.f32 0.0, %v520
    %v522 = vpop.f32.mrb[0].mxu0
    %523 = vdwg.mxu0
    %v524 = vmul.f32 %v445, %v445
    %525 = vmatprep.subr.mxu0 0.0
    %526 = vmatpush1.msra.mxu0 %v524
    %527 = vmatprep.subr.mxu0 0.0
    %528 = vmatpush1.msra.mxu0 0.0
    %529 = vmatprep.subr.mxu0 0.0
    %530 = vmatpush1.msra.mxu0 0.0
    %531 = vmatprep.subr.mxu0 0.0
    %532 = vmatpush1.msra.mxu0 0.0
    %533 = vmatprep.subr.mxu0 0.0
    %534 = vmatpush1.msra.mxu0 0.0
    %535 = vmatprep.subr.mxu0 0.0
    %536 = vmatpush1.msra.mxu0 0.0
    %537 = vmatprep.subr.mxu0 0.0
    %538 = vmatpush1.msra.mxu0 0.0
    %539 = vmatprep.subr.mxu0 0.0
    %540 = vmatpush1.msra.mxu0 0.0
    %541 = vmatprep.subr.mxu0 0.0
    %542 = vmatpush1.msra.mxu0 0.0
    %543 = vmatprep.subr.mxu0 0.0
    %544 = vmatpush1.msra.mxu0 0.0
    %545 = vmatprep.subr.mxu0 0.0
    %546 = vmatpush1.msra.mxu0 0.0
    %547 = vmatprep.subr.mxu0 0.0
    %548 = vmatpush1.msra.mxu0 0.0
    %549 = vmatprep.subr.mxu0 0.0
    %550 = vmatpush1.msra.mxu0 0.0
    %551 = vmatprep.subr.mxu0 0.0
    %552 = vmatpush1.msra.mxu0 0.0
    %553 = vmatprep.subr.mxu0 0.0
    %554 = vmatpush1.msra.mxu0 0.0
    %555 = vmatprep.subr.mxu0 0.0
    %556 = vmatpush1.msra.mxu0 0.0
    %557 = vmatprep.subr.mxu0 0.0
    %558 = vmatpush1.msra.mxu0 0.0
    %559 = vmatprep.subr.mxu0 0.0
    %560 = vmatpush1.msra.mxu0 0.0
    %561 = vmatprep.subr.mxu0 0.0
    %562 = vmatpush1.msra.mxu0 0.0
    %563 = vmatprep.subr.mxu0 0.0
    %564 = vmatpush1.msra.mxu0 0.0
    %565 = vmatprep.subr.mxu0 0.0
    %566 = vmatpush1.msra.mxu0 0.0
    %567 = vmatprep.subr.mxu0 0.0
    %568 = vmatpush1.msra.mxu0 0.0
    %569 = vmatprep.subr.mxu0 0.0
    %570 = vmatpush1.msra.mxu0 0.0
    %571 = vmatprep.subr.mxu0 0.0
    %572 = vmatpush1.msra.mxu0 0.0
    %573 = vmatprep.subr.mxu0 0.0
    %574 = vmatpush1.msra.mxu0 0.0
    %575 = vmatprep.subr.mxu0 0.0
    %576 = vmatpush1.msra.mxu0 0.0
    %577 = vmatprep.subr.mxu0 0.0
    %578 = vmatpush1.msra.mxu0 0.0
    %579 = vmatprep.subr.mxu0 0.0
    %580 = vmatpush1.msra.mxu0 0.0
    %581 = vmatprep.subr.mxu0 0.0
    %582 = vmatpush1.msra.mxu0 0.0
    %583 = vmatprep.subr.mxu0 0.0
    %584 = vmatpush1.msra.mxu0 0.0
    %585 = vmatprep.subr.mxu0 0.0
    %586 = vmatpush1.msra.mxu0 0.0
    %587 = vmatprep.subr.mxu0 0.0
    %588 = vmatpush1.msra.mxu0 0.0
    %589 = vmatprep.mubr.f32.mxu0 0.0
    %590 = vmatmul.mubr.f32.gmra.mrb[0].mxu0 %v452
    %v591 = vpop.f32.mrb[0].mxu0
    %v592 = vadd.f32 0.0, %v591
    %v593 = vpop.f32.mrb[0].mxu0
    %594 = vdwg.mxu0
    %v595 = vstv %s90
    %v596 = vmul.f32 %v521, %v595
    %v597 = vmul.f32 %v592, %v595
    %v598 = vmul.f32 %v596, %v596
    %v599 = vsub.f32 %v597, %v598
    %v600 = vmax.f32 %v599, 0.0
    %v601 = vadd.f32 %v600, 0.8
    %v602 = vrsqrt.pop %v601
    %v604 = vrot.slane %v602, 7
    %v606 = vmul.f32 %v97, %v604
    %v608 = vrot.slane %v606, 1
    %v610 = vmul.f32 %v596, %v608
    %v612 = vrot.slane %v610, 6
    %v614 = vsub.f32 %v97, %v612
    %v615 = vlaneseq
    %v616 = vshrl.u32 %v615, 7
    %v617 = vsub.s32 1, %v616
    %v618 = vrot.slane %v606, %v617
    %v619 = vmul.f32 %v445, %v618
    %v620 = vlaneseq
    %v621 = vshrl.u32 %v620, 7
    %v622 = vsub.s32 2, %v621
    %v623 = vrot.slane %v614, %v622
    %v624 = vadd.f32 %v619, %v623
    %v625 = vmul.f32 %v624, 0.25
    %v626 = vmax.f32 %v624, %v625
    %v627 = vpack.c.bf16 %v626, %v626
    %v628 = vld [vmem:[#allocation5] sm:$0xff]
    %v629 = vld [vmem:[#allocation5 + $0x8] sm:$0xff]
    %v630 = vld [vmem:[#allocation5 + $0x10] sm:$0xff]
    %v631 = vld [vmem:[#allocation5 + $0x18] sm:$0xff]
    %v632 = vld [vmem:[#allocation5 + $0x20] sm:$0xff]
    %v633 = vld [vmem:[#allocation5 + $0x28] sm:$0xff]
    %v634 = vld [vmem:[#allocation5 + $0x30] sm:$0xff]
    %v635 = vld [vmem:[#allocation5 + $0x38] sm:$0xff]
    %v636 = vld [vmem:[#allocation5 + $0x40] sm:$0xff]
    %v637 = vld [vmem:[#allocation5 + $0x48] sm:$0xff]
    %v638 = vld [vmem:[#allocation5 + $0x50] sm:$0xff]
    %v639 = vld [vmem:[#allocation5 + $0x58] sm:$0xff]
    %v640 = vld [vmem:[#allocation5 + $0x60] sm:$0xff]
    %v641 = vld [vmem:[#allocation5 + $0x68] sm:$0xff]
    %v642 = vld [vmem:[#allocation5 + $0x70] sm:$0xff]
    %v643 = vld [vmem:[#allocation5 + $0x78] sm:$0xff]
    %v660 = vunpack.c.l.b16 %v628
    %v661 = vunpack.c.h.b16 %v628
    %v662 = vunpack.c.l.b16 %v629
    %v663 = vunpack.c.h.b16 %v629
    %v664 = vunpack.c.l.b16 %v630
    %v665 = vunpack.c.h.b16 %v630
    %v666 = vunpack.c.l.b16 %v631
    %v667 = vunpack.c.h.b16 %v631
    %v668 = vunpack.c.l.b16 %v632
    %v669 = vunpack.c.h.b16 %v632
    %v670 = vunpack.c.l.b16 %v633
    %v671 = vunpack.c.h.b16 %v633
    %v672 = vunpack.c.l.b16 %v634
    %v673 = vunpack.c.h.b16 %v634
    %v674 = vunpack.c.l.b16 %v635
    %v675 = vunpack.c.h.b16 %v635
    %v676 = vunpack.c.l.b16 %v636
    %v677 = vunpack.c.h.b16 %v636
    %v678 = vunpack.c.l.b16 %v637
    %v679 = vunpack.c.h.b16 %v637
    %v680 = vunpack.c.l.b16 %v638
    %v681 = vunpack.c.h.b16 %v638
    %v682 = vunpack.c.l.b16 %v639
    %v683 = vunpack.c.h.b16 %v639
    %v684 = vunpack.c.l.b16 %v640
    %v685 = vunpack.c.h.b16 %v640
    %v686 = vunpack.c.l.b16 %v641
    %v687 = vunpack.c.h.b16 %v641
    %v688 = vunpack.c.l.b16 %v642
    %v689 = vunpack.c.h.b16 %v642
    %v690 = vunpack.c.l.b16 %v643
    %v691 = vunpack.c.h.b16 %v643
    %v692 = vpack.c.b16 %v662, %v660
    %v693 = vpack.c.b16 %v663, %v661
    %v694 = vpack.c.b16 %v666, %v664
    %v695 = vpack.c.b16 %v667, %v665
    %v696 = vpack.c.b16 %v670, %v668
    %v697 = vpack.c.b16 %v671, %v669
    %v698 = vpack.c.b16 %v674, %v672
    %v699 = vpack.c.b16 %v675, %v673
    %v700 = vpack.c.b16 %v678, %v676
    %v701 = vpack.c.b16 %v679, %v677
    %v702 = vpack.c.b16 %v682, %v680
    %v703 = vpack.c.b16 %v683, %v681
    %v704 = vpack.c.b16 %v686, %v684
    %v705 = vpack.c.b16 %v687, %v685
    %v706 = vpack.c.b16 %v690, %v688
    %v707 = vpack.c.b16 %v691, %v689
    %724 = vmatprep.subr.bf16.mxu0 %v693
    %725 = vmatpush1.bf16.msra.mxu0 %v692
    %726 = vmatprep.subr.bf16.mxu0 %v695
    %727 = vmatpush1.bf16.msra.mxu0 %v694
    %728 = vmatprep.subr.bf16.mxu0 %v697
    %729 = vmatpush1.bf16.msra.mxu0 %v696
    %730 = vmatprep.subr.bf16.mxu0 %v699
    %731 = vmatpush1.bf16.msra.mxu0 %v698
    %732 = vmatprep.subr.bf16.mxu0 %v701
    %733 = vmatpush1.bf16.msra.mxu0 %v700
    %734 = vmatprep.subr.bf16.mxu0 %v703
    %735 = vmatpush1.bf16.msra.mxu0 %v702
    %736 = vmatprep.subr.bf16.mxu0 %v705
    %737 = vmatpush1.bf16.msra.mxu0 %v704
    %738 = vmatprep.subr.bf16.mxu0 %v707
    %739 = vmatpush1.bf16.msra.mxu0 %v706
    %740 = vmatprep.subr.bf16.mxu0 0
    %741 = vmatpush1.bf16.msra.mxu0 0
    %742 = vmatprep.subr.bf16.mxu0 0
    %743 = vmatpush1.bf16.msra.mxu0 0
    %744 = vmatprep.subr.bf16.mxu0 0
    %745 = vmatpush1.bf16.msra.mxu0 0
    %746 = vmatprep.subr.bf16.mxu0 0
    %747 = vmatpush1.bf16.msra.mxu0 0
    %748 = vmatprep.subr.bf16.mxu0 0
    %749 = vmatpush1.bf16.msra.mxu0 0
    %750 = vmatprep.subr.bf16.mxu0 0
    %751 = vmatpush1.bf16.msra.mxu0 0
    %752 = vmatprep.subr.bf16.mxu0 0
    %753 = vmatpush1.bf16.msra.mxu0 0
    %754 = vmatprep.subr.bf16.mxu0 0
    %755 = vmatpush1.bf16.msra.mxu0 0
    %756 = vmatprep.mubr.bf16.mxu0 0
    %757 = vmatmul.mubr.bf16.gmra.mrb[0].mxu0 %v627
    %v758 = vpop.f32.mrb[0].mxu0
    %v759 = vadd.f32 0.0, %v758
    %v760 = vpop.f32.mrb[0].mxu0
    %v761 = vadd.f32 0.0, %v760
    %v762 = vpop.f32.mrb[0].mxu0
    %v763 = vpop.f32.mrb[0].mxu0
    %764 = vdwg.mxu0
    %765 = vmatprep.subr.mxu0 %v761
    %766 = vmatpush1.msra.mxu0 %v759
    %767 = vmatprep.subr.mxu0 0.0
    %768 = vmatpush1.msra.mxu0 0.0
    %769 = vmatprep.subr.mxu0 0.0
    %770 = vmatpush1.msra.mxu0 0.0
    %771 = vmatprep.subr.mxu0 0.0
    %772 = vmatpush1.msra.mxu0 0.0
    %773 = vmatprep.subr.mxu0 0.0
    %774 = vmatpush1.msra.mxu0 0.0
    %775 = vmatprep.subr.mxu0 0.0
    %776 = vmatpush1.msra.mxu0 0.0
    %777 = vmatprep.subr.mxu0 0.0
    %778 = vmatpush1.msra.mxu0 0.0
    %779 = vmatprep.subr.mxu0 0.0
    %780 = vmatpush1.msra.mxu0 0.0
    %781 = vmatprep.subr.mxu0 0.0
    %782 = vmatpush1.msra.mxu0 0.0
    %783 = vmatprep.subr.mxu0 0.0
    %784 = vmatpush1.msra.mxu0 0.0
    %785 = vmatprep.subr.mxu0 0.0
    %786 = vmatpush1.msra.mxu0 0.0
    %787 = vmatprep.subr.mxu0 0.0
    %788 = vmatpush1.msra.mxu0 0.0
    %789 = vmatprep.subr.mxu0 0.0
    %790 = vmatpush1.msra.mxu0 0.0
    %791 = vmatprep.subr.mxu0 0.0
    %792 = vmatpush1.msra.mxu0 0.0
    %793 = vmatprep.subr.mxu0 0.0
    %794 = vmatpush1.msra.mxu0 0.0
    %795 = vmatprep.subr.mxu0 0.0
    %796 = vmatpush1.msra.mxu0 0.0
    %797 = vmatprep.subr.mxu0 0.0
    %798 = vmatpush1.msra.mxu0 0.0
    %799 = vmatprep.subr.mxu0 0.0
    %800 = vmatpush1.msra.mxu0 0.0
    %801 = vmatprep.subr.mxu0 0.0
    %802 = vmatpush1.msra.mxu0 0.0
    %803 = vmatprep.subr.mxu0 0.0
    %804 = vmatpush1.msra.mxu0 0.0
    %805 = vmatprep.subr.mxu0 0.0
    %806 = vmatpush1.msra.mxu0 0.0
    %807 = vmatprep.subr.mxu0 0.0
    %808 = vmatpush1.msra.mxu0 0.0
    %809 = vmatprep.subr.mxu0 0.0
    %810 = vmatpush1.msra.mxu0 0.0
    %811 = vmatprep.subr.mxu0 0.0
    %812 = vmatpush1.msra.mxu0 0.0
    %813 = vmatprep.subr.mxu0 0.0
    %814 = vmatpush1.msra.mxu0 0.0
    %815 = vmatprep.subr.mxu0 0.0
    %816 = vmatpush1.msra.mxu0 0.0
    %817 = vmatprep.subr.mxu0 0.0
    %818 = vmatpush1.msra.mxu0 0.0
    %819 = vmatprep.subr.mxu0 0.0
    %820 = vmatpush1.msra.mxu0 0.0
    %821 = vmatprep.subr.mxu0 0.0
    %822 = vmatpush1.msra.mxu0 0.0
    %823 = vmatprep.subr.mxu0 0.0
    %824 = vmatpush1.msra.mxu0 0.0
    %825 = vmatprep.subr.mxu0 0.0
    %826 = vmatpush1.msra.mxu0 0.0
    %827 = vmatprep.subr.mxu0 0.0
    %828 = vmatpush1.msra.mxu0 0.0
    %829 = vmatprep.mubr.f32.mxu0 0.0
    %830 = vmatmul.mubr.f32.gmra.mrb[0].mxu0 %v452
    %v831 = vpop.f32.mrb[0].mxu0
    %v832 = vadd.f32 0.0, %v831
    %v833 = vpop.f32.mrb[0].mxu0
    %v834 = vadd.f32 0.0, %v833
    %835 = vdwg.mxu0
    %v836 = vmul.f32 %v759, %v759
    %v837 = vmul.f32 %v761, %v761
    %838 = vmatprep.subr.mxu0 %v837
    %839 = vmatpush1.msra.mxu0 %v836
    %840 = vmatprep.subr.mxu0 0.0
    %841 = vmatpush1.msra.mxu0 0.0
    %842 = vmatprep.subr.mxu0 0.0
    %843 = vmatpush1.msra.mxu0 0.0
    %844 = vmatprep.subr.mxu0 0.0
    %845 = vmatpush1.msra.mxu0 0.0
    %846 = vmatprep.subr.mxu0 0.0
    %847 = vmatpush1.msra.mxu0 0.0
    %848 = vmatprep.subr.mxu0 0.0
    %849 = vmatpush1.msra.mxu0 0.0
    %850 = vmatprep.subr.mxu0 0.0
    %851 = vmatpush1.msra.mxu0 0.0
    %852 = vmatprep.subr.mxu0 0.0
    %853 = vmatpush1.msra.mxu0 0.0
    %854 = vmatprep.subr.mxu0 0.0
    %855 = vmatpush1.msra.mxu0 0.0
    %856 = vmatprep.subr.mxu0 0.0
    %857 = vmatpush1.msra.mxu0 0.0
    %858 = vmatprep.subr.mxu0 0.0
    %859 = vmatpush1.msra.mxu0 0.0
    %860 = vmatprep.subr.mxu0 0.0
    %861 = vmatpush1.msra.mxu0 0.0
    %862 = vmatprep.subr.mxu0 0.0
    %863 = vmatpush1.msra.mxu0 0.0
    %864 = vmatprep.subr.mxu0 0.0
    %865 = vmatpush1.msra.mxu0 0.0
    %866 = vmatprep.subr.mxu0 0.0
    %867 = vmatpush1.msra.mxu0 0.0
    %868 = vmatprep.subr.mxu0 0.0
    %869 = vmatpush1.msra.mxu0 0.0
    %870 = vmatprep.subr.mxu0 0.0
    %871 = vmatpush1.msra.mxu0 0.0
    %872 = vmatprep.subr.mxu0 0.0
    %873 = vmatpush1.msra.mxu0 0.0
    %874 = vmatprep.subr.mxu0 0.0
    %875 = vmatpush1.msra.mxu0 0.0
    %876 = vmatprep.subr.mxu0 0.0
    %877 = vmatpush1.msra.mxu0 0.0
    %878 = vmatprep.subr.mxu0 0.0
    %879 = vmatpush1.msra.mxu0 0.0
    %880 = vmatprep.subr.mxu0 0.0
    %881 = vmatpush1.msra.mxu0 0.0
    %882 = vmatprep.subr.mxu0 0.0
    %883 = vmatpush1.msra.mxu0 0.0
    %884 = vmatprep.subr.mxu0 0.0
    %885 = vmatpush1.msra.mxu0 0.0
    %886 = vmatprep.subr.mxu0 0.0
    %887 = vmatpush1.msra.mxu0 0.0
    %888 = vmatprep.subr.mxu0 0.0
    %889 = vmatpush1.msra.mxu0 0.0
    %890 = vmatprep.subr.mxu0 0.0
    %891 = vmatpush1.msra.mxu0 0.0
    %892 = vmatprep.subr.mxu0 0.0
    %893 = vmatpush1.msra.mxu0 0.0
    %894 = vmatprep.subr.mxu0 0.0
    %895 = vmatpush1.msra.mxu0 0.0
    %896 = vmatprep.subr.mxu0 0.0
    %897 = vmatpush1.msra.mxu0 0.0
    %898 = vmatprep.subr.mxu0 0.0
    %899 = vmatpush1.msra.mxu0 0.0
    %900 = vmatprep.subr.mxu0 0.0
    %901 = vmatpush1.msra.mxu0 0.0
    %902 = vmatprep.mubr.f32.mxu0 0.0
    %903 = vmatmul.mubr.f32.gmra.mrb[0].mxu0 %v452
    %v904 = vpop.f32.mrb[0].mxu0
    %v905 = vadd.f32 0.0, %v904
    %v906 = vpop.f32.mrb[0].mxu0
    %v907 = vadd.f32 0.0, %v906
    %908 = vdwg.mxu0
    %v909 = vmul.f32 %v832, %v595
    %v910 = vmul.f32 %v834, %v595
    %v911 = vmul.f32 %v905, %v595
    %v912 = vmul.f32 %v907, %v595
    %v913 = vmul.f32 %v909, %v909
    %v914 = vmul.f32 %v910, %v910
    %v915 = vsub.f32 %v911, %v913
    %v916 = vsub.f32 %v912, %v914
    %v917 = vmax.f32 %v915, 0.0
    %v918 = vmax.f32 %v916, 0.0
    %v919 = vadd.f32 %v917, 0.8
    %v920 = vadd.f32 %v918, 0.8
    %v921 = vrsqrt.pop %v919
    %v922 = vrsqrt.pop %v920
    %v925 = vrot.slane %v921, 5
    %v926 = vrot.slane %v922, 5
    %v929 = vmul.f32 %v97, %v925
    %v930 = vmul.f32 %v98, %v926
    %v933 = vrot.slane %v929, 3
    %v934 = vrot.slane %v930, 3
    %v937 = vmul.f32 %v909, %v933
    %v938 = vmul.f32 %v910, %v934
    %v941 = vrot.slane %v937, 4
    %v942 = vrot.slane %v938, 4
    %v945 = vsub.f32 %v97, %v941
    %v946 = vsub.f32 %v98, %v942
    %v947 = vlaneseq
    %v948 = vshrl.u32 %v947, 7
    %v949 = vsub.s32 3, %v948
    %v950 = vrot.slane %v929, %v949
    %v951 = vlaneseq
    %v952 = vshrl.u32 %v951, 7
    %v953 = vsub.s32 3, %v952
    %v954 = vrot.slane %v930, %v953
    %v955 = vmul.f32 %v759, %v950
    %v956 = vmul.f32 %v761, %v954
    %v957 = vlaneseq
    %v958 = vshrl.u32 %v957, 7
    %v959 = vsub.s32 4, %v958
    %v960 = vrot.slane %v945, %v959
    %v961 = vlaneseq
    %v962 = vshrl.u32 %v961, 7
    %v963 = vsub.s32 4, %v962
    %v964 = vrot.slane %v946, %v963
    %v965 = vadd.f32 %v955, %v960
    %v966 = vadd.f32 %v956, %v964
    %v967 = vmul.f32 %v965, 0.25
    %v968 = vmul.f32 %v966, 0.25
    %v969 = vmax.f32 %v965, %v967
    %v970 = vmax.f32 %v966, %v968
    %v971 = vpack.c.bf16 %v969, %v969
    %v972 = vpack.c.bf16 %v970, %v970
    %v973 = vld [vmem:[#allocation7] sm:$0xff]
    %v974 = vld [vmem:[#allocation7 + $0x8] sm:$0xff]
    %v975 = vld [vmem:[#allocation7 + $0x10] sm:$0xff]
    %v976 = vld [vmem:[#allocation7 + $0x18] sm:$0xff]
    %v977 = vld [vmem:[#allocation7 + $0x20] sm:$0xff]
    %v978 = vld [vmem:[#allocation7 + $0x28] sm:$0xff]
    %v979 = vld [vmem:[#allocation7 + $0x30] sm:$0xff]
    %v980 = vld [vmem:[#allocation7 + $0x38] sm:$0xff]
    %v981 = vld [vmem:[#allocation7 + $0x40] sm:$0xff]
    %v982 = vld [vmem:[#allocation7 + $0x48] sm:$0xff]
    %v983 = vld [vmem:[#allocation7 + $0x50] sm:$0xff]
    %v984 = vld [vmem:[#allocation7 + $0x58] sm:$0xff]
    %v985 = vld [vmem:[#allocation7 + $0x60] sm:$0xff]
    %v986 = vld [vmem:[#allocation7 + $0x68] sm:$0xff]
    %v987 = vld [vmem:[#allocation7 + $0x70] sm:$0xff]
    %v988 = vld [vmem:[#allocation7 + $0x78] sm:$0xff]
    %v989 = vld [vmem:[#allocation7 + $0x80] sm:$0xff]
    %v990 = vld [vmem:[#allocation7 + $0x88] sm:$0xff]
    %v991 = vld [vmem:[#allocation7 + $0x90] sm:$0xff]
    %v992 = vld [vmem:[#allocation7 + $0x98] sm:$0xff]
    %v993 = vld [vmem:[#allocation7 + $0xa0] sm:$0xff]
    %v994 = vld [vmem:[#allocation7 + $0xa8] sm:$0xff]
    %v995 = vld [vmem:[#allocation7 + $0xb0] sm:$0xff]
    %v996 = vld [vmem:[#allocation7 + $0xb8] sm:$0xff]
    %v997 = vld [vmem:[#allocation7 + $0xc0] sm:$0xff]
    %v998 = vld [vmem:[#allocation7 + $0xc8] sm:$0xff]
    %v999 = vld [vmem:[#allocation7 + $0xd0] sm:$0xff]
    %v1000 = vld [vmem:[#allocation7 + $0xd8] sm:$0xff]
    %v1001 = vld [vmem:[#allocation7 + $0xe0] sm:$0xff]
    %v1002 = vld [vmem:[#allocation7 + $0xe8] sm:$0xff]
    %v1003 = vld [vmem:[#allocation7 + $0xf0] sm:$0xff]
    %v1004 = vld [vmem:[#allocation7 + $0xf8] sm:$0xff]
    %v1005 = vld [vmem:[#allocation7 + $0x100] sm:$0xff]
    %v1006 = vld [vmem:[#allocation7 + $0x108] sm:$0xff]
    %v1007 = vld [vmem:[#allocation7 + $0x110] sm:$0xff]
    %v1008 = vld [vmem:[#allocation7 + $0x118] sm:$0xff]
    %v1009 = vld [vmem:[#allocation7 + $0x120] sm:$0xff]
    %v1010 = vld [vmem:[#allocation7 + $0x128] sm:$0xff]
    %v1011 = vld [vmem:[#allocation7 + $0x130] sm:$0xff]
    %v1012 = vld [vmem:[#allocation7 + $0x138] sm:$0xff]
    %v1013 = vld [vmem:[#allocation7 + $0x140] sm:$0xff]
    %v1014 = vld [vmem:[#allocation7 + $0x148] sm:$0xff]
    %v1015 = vld [vmem:[#allocation7 + $0x150] sm:$0xff]
    %v1016 = vld [vmem:[#allocation7 + $0x158] sm:$0xff]
    %v1017 = vld [vmem:[#allocation7 + $0x160] sm:$0xff]
    %v1018 = vld [vmem:[#allocation7 + $0x168] sm:$0xff]
    %v1019 = vld [vmem:[#allocation7 + $0x170] sm:$0xff]
    %v1020 = vld [vmem:[#allocation7 + $0x178] sm:$0xff]
    %v1021 = vld [vmem:[#allocation7 + $0x180] sm:$0xff]
    %v1022 = vld [vmem:[#allocation7 + $0x188] sm:$0xff]
    %v1023 = vld [vmem:[#allocation7 + $0x190] sm:$0xff]
    %v1024 = vld [vmem:[#allocation7 + $0x198] sm:$0xff]
    %v1025 = vld [vmem:[#allocation7 + $0x1a0] sm:$0xff]
    %v1026 = vld [vmem:[#allocation7 + $0x1a8] sm:$0xff]
    %v1027 = vld [vmem:[#allocation7 + $0x1b0] sm:$0xff]
    %v1028 = vld [vmem:[#allocation7 + $0x1b8] sm:$0xff]
    %v1029 = vld [vmem:[#allocation7 + $0x1c0] sm:$0xff]
    %v1030 = vld [vmem:[#allocation7 + $0x1c8] sm:$0xff]
    %v1031 = vld [vmem:[#allocation7 + $0x1d0] sm:$0xff]
    %v1032 = vld [vmem:[#allocation7 + $0x1d8] sm:$0xff]
    %v1033 = vld [vmem:[#allocation7 + $0x1e0] sm:$0xff]
    %v1034 = vld [vmem:[#allocation7 + $0x1e8] sm:$0xff]
    %v1035 = vld [vmem:[#allocation7 + $0x1f0] sm:$0xff]
    %v1036 = vld [vmem:[#allocation7 + $0x1f8] sm:$0xff]
    %v1101 = vunpack.c.l.b16 %v973
    %v1102 = vunpack.c.h.b16 %v973
    %v1103 = vunpack.c.l.b16 %v974
    %v1104 = vunpack.c.h.b16 %v974
    %v1105 = vunpack.c.l.b16 %v975
    %v1106 = vunpack.c.h.b16 %v975
    %v1107 = vunpack.c.l.b16 %v976
    %v1108 = vunpack.c.h.b16 %v976
    %v1109 = vunpack.c.l.b16 %v977
    %v1110 = vunpack.c.h.b16 %v977
    %v1111 = vunpack.c.l.b16 %v978
    %v1112 = vunpack.c.h.b16 %v978
    %v1113 = vunpack.c.l.b16 %v979
    %v1114 = vunpack.c.h.b16 %v979
    %v1115 = vunpack.c.l.b16 %v980
    %v1116 = vunpack.c.h.b16 %v980
    %v1117 = vunpack.c.l.b16 %v981
    %v1118 = vunpack.c.h.b16 %v981
    %v1119 = vunpack.c.l.b16 %v982
    %v1120 = vunpack.c.h.b16 %v982
    %v1121 = vunpack.c.l.b16 %v983
    %v1122 = vunpack.c.h.b16 %v983
    %v1123 = vunpack.c.l.b16 %v984
    %v1124 = vunpack.c.h.b16 %v984
    %v1125 = vunpack.c.l.b16 %v985
    %v1126 = vunpack.c.h.b16 %v985
    %v1127 = vunpack.c.l.b16 %v986
    %v1128 = vunpack.c.h.b16 %v986
    %v1129 = vunpack.c.l.b16 %v987
    %v1130 = vunpack.c.h.b16 %v987
    %v1131 = vunpack.c.l.b16 %v988
    %v1132 = vunpack.c.h.b16 %v988
    %v1133 = vunpack.c.l.b16 %v989
    %v1134 = vunpack.c.h.b16 %v989
    %v1135 = vunpack.c.l.b16 %v990
    %v1136 = vunpack.c.h.b16 %v990
    %v1137 = vunpack.c.l.b16 %v991
    %v1138 = vunpack.c.h.b16 %v991
    %v1139 = vunpack.c.l.b16 %v992
    %v1140 = vunpack.c.h.b16 %v992
    %v1141 = vunpack.c.l.b16 %v993
    %v1142 = vunpack.c.h.b16 %v993
    %v1143 = vunpack.c.l.b16 %v994
    %v1144 = vunpack.c.h.b16 %v994
    %v1145 = vunpack.c.l.b16 %v995
    %v1146 = vunpack.c.h.b16 %v995
    %v1147 = vunpack.c.l.b16 %v996
    %v1148 = vunpack.c.h.b16 %v996
    %v1149 = vunpack.c.l.b16 %v997
    %v1150 = vunpack.c.h.b16 %v997
    %v1151 = vunpack.c.l.b16 %v998
    %v1152 = vunpack.c.h.b16 %v998
    %v1153 = vunpack.c.l.b16 %v999
    %v1154 = vunpack.c.h.b16 %v999
    %v1155 = vunpack.c.l.b16 %v1000
    %v1156 = vunpack.c.h.b16 %v1000
    %v1157 = vunpack.c.l.b16 %v1001
    %v1158 = vunpack.c.h.b16 %v1001
    %v1159 = vunpack.c.l.b16 %v1002
    %v1160 = vunpack.c.h.b16 %v1002
    %v1161 = vunpack.c.l.b16 %v1003
    %v1162 = vunpack.c.h.b16 %v1003
    %v1163 = vunpack.c.l.b16 %v1004
    %v1164 = vunpack.c.h.b16 %v1004
    %v1165 = vunpack.c.l.b16 %v1005
    %v1166 = vunpack.c.h.b16 %v1005
    %v1167 = vunpack.c.l.b16 %v1006
    %v1168 = vunpack.c.h.b16 %v1006
    %v1169 = vunpack.c.l.b16 %v1007
    %v1170 = vunpack.c.h.b16 %v1007
    %v1171 = vunpack.c.l.b16 %v1008
    %v1172 = vunpack.c.h.b16 %v1008
    %v1173 = vunpack.c.l.b16 %v1009
    %v1174 = vunpack.c.h.b16 %v1009
    %v1175 = vunpack.c.l.b16 %v1010
    %v1176 = vunpack.c.h.b16 %v1010
    %v1177 = vunpack.c.l.b16 %v1011
    %v1178 = vunpack.c.h.b16 %v1011
    %v1179 = vunpack.c.l.b16 %v1012
    %v1180 = vunpack.c.h.b16 %v1012
    %v1181 = vunpack.c.l.b16 %v1013
    %v1182 = vunpack.c.h.b16 %v1013
    %v1183 = vunpack.c.l.b16 %v1014
    %v1184 = vunpack.c.h.b16 %v1014
    %v1185 = vunpack.c.l.b16 %v1015
    %v1186 = vunpack.c.h.b16 %v1015
    %v1187 = vunpack.c.l.b16 %v1016
    %v1188 = vunpack.c.h.b16 %v1016
    %v1189 = vunpack.c.l.b16 %v1017
    %v1190 = vunpack.c.h.b16 %v1017
    %v1191 = vunpack.c.l.b16 %v1018
    %v1192 = vunpack.c.h.b16 %v1018
    %v1193 = vunpack.c.l.b16 %v1019
    %v1194 = vunpack.c.h.b16 %v1019
    %v1195 = vunpack.c.l.b16 %v1020
    %v1196 = vunpack.c.h.b16 %v1020
    %v1197 = vunpack.c.l.b16 %v1021
    %v1198 = vunpack.c.h.b16 %v1021
    %v1199 = vunpack.c.l.b16 %v1022
    %v1200 = vunpack.c.h.b16 %v1022
    %v1201 = vunpack.c.l.b16 %v1023
    %v1202 = vunpack.c.h.b16 %v1023
    %v1203 = vunpack.c.l.b16 %v1024
    %v1204 = vunpack.c.h.b16 %v1024
    %v1205 = vunpack.c.l.b16 %v1025
    %v1206 = vunpack.c.h.b16 %v1025
    %v1207 = vunpack.c.l.b16 %v1026
    %v1208 = vunpack.c.h.b16 %v1026
    %v1209 = vunpack.c.l.b16 %v1027
    %v1210 = vunpack.c.h.b16 %v1027
    %v1211 = vunpack.c.l.b16 %v1028
    %v1212 = vunpack.c.h.b16 %v1028
    %v1213 = vunpack.c.l.b16 %v1029
    %v1214 = vunpack.c.h.b16 %v1029
    %v1215 = vunpack.c.l.b16 %v1030
    %v1216 = vunpack.c.h.b16 %v1030
    %v1217 = vunpack.c.l.b16 %v1031
    %v1218 = vunpack.c.h.b16 %v1031
    %v1219 = vunpack.c.l.b16 %v1032
    %v1220 = vunpack.c.h.b16 %v1032
    %v1221 = vunpack.c.l.b16 %v1033
    %v1222 = vunpack.c.h.b16 %v1033
    %v1223 = vunpack.c.l.b16 %v1034
    %v1224 = vunpack.c.h.b16 %v1034
    %v1225 = vunpack.c.l.b16 %v1035
    %v1226 = vunpack.c.h.b16 %v1035
    %v1227 = vunpack.c.l.b16 %v1036
    %v1228 = vunpack.c.h.b16 %v1036
    %v1229 = vpack.c.b16 %v1105, %v1101
    %v1230 = vpack.c.b16 %v1106, %v1102
    %v1231 = vpack.c.b16 %v1107, %v1103
    %v1232 = vpack.c.b16 %v1108, %v1104
    %v1233 = vpack.c.b16 %v1113, %v1109
    %v1234 = vpack.c.b16 %v1114, %v1110
    %v1235 = vpack.c.b16 %v1115, %v1111
    %v1236 = vpack.c.b16 %v1116, %v1112
    %v1237 = vpack.c.b16 %v1121, %v1117
    %v1238 = vpack.c.b16 %v1122, %v1118
    %v1239 = vpack.c.b16 %v1123, %v1119
    %v1240 = vpack.c.b16 %v1124, %v1120
    %v1241 = vpack.c.b16 %v1129, %v1125
    %v1242 = vpack.c.b16 %v1130, %v1126
    %v1243 = vpack.c.b16 %v1131, %v1127
    %v1244 = vpack.c.b16 %v1132, %v1128
    %v1245 = vpack.c.b16 %v1137, %v1133
    %v1246 = vpack.c.b16 %v1138, %v1134
    %v1247 = vpack.c.b16 %v1139, %v1135
    %v1248 = vpack.c.b16 %v1140, %v1136
    %v1249 = vpack.c.b16 %v1145, %v1141
    %v1250 = vpack.c.b16 %v1146, %v1142
    %v1251 = vpack.c.b16 %v1147, %v1143
    %v1252 = vpack.c.b16 %v1148, %v1144
    %v1253 = vpack.c.b16 %v1153, %v1149
    %v1254 = vpack.c.b16 %v1154, %v1150
    %v1255 = vpack.c.b16 %v1155, %v1151
    %v1256 = vpack.c.b16 %v1156, %v1152
    %v1257 = vpack.c.b16 %v1161, %v1157
    %v1258 = vpack.c.b16 %v1162, %v1158
    %v1259 = vpack.c.b16 %v1163, %v1159
    %v1260 = vpack.c.b16 %v1164, %v1160
    %v1261 = vpack.c.b16 %v1169, %v1165
    %v1262 = vpack.c.b16 %v1170, %v1166
    %v1263 = vpack.c.b16 %v1171, %v1167
    %v1264 = vpack.c.b16 %v1172, %v1168
    %v1265 = vpack.c.b16 %v1177, %v1173
    %v1266 = vpack.c.b16 %v1178, %v1174
    %v1267 = vpack.c.b16 %v1179, %v1175
    %v1268 = vpack.c.b16 %v1180, %v1176
    %v1269 = vpack.c.b16 %v1185, %v1181
    %v1270 = vpack.c.b16 %v1186, %v1182
    %v1271 = vpack.c.b16 %v1187, %v1183
    %v1272 = vpack.c.b16 %v1188, %v1184
    %v1273 = vpack.c.b16 %v1193, %v1189
    %v1274 = vpack.c.b16 %v1194, %v1190
    %v1275 = vpack.c.b16 %v1195, %v1191
    %v1276 = vpack.c.b16 %v1196, %v1192
    %v1277 = vpack.c.b16 %v1201, %v1197
    %v1278 = vpack.c.b16 %v1202, %v1198
    %v1279 = vpack.c.b16 %v1203, %v1199
    %v1280 = vpack.c.b16 %v1204, %v1200
    %v1281 = vpack.c.b16 %v1209, %v1205
    %v1282 = vpack.c.b16 %v1210, %v1206
    %v1283 = vpack.c.b16 %v1211, %v1207
    %v1284 = vpack.c.b16 %v1212, %v1208
    %v1285 = vpack.c.b16 %v1217, %v1213
    %v1286 = vpack.c.b16 %v1218, %v1214
    %v1287 = vpack.c.b16 %v1219, %v1215
    %v1288 = vpack.c.b16 %v1220, %v1216
    %v1289 = vpack.c.b16 %v1225, %v1221
    %v1290 = vpack.c.b16 %v1226, %v1222
    %v1291 = vpack.c.b16 %v1227, %v1223
    %v1292 = vpack.c.b16 %v1228, %v1224
    %1357 = vmatprep.subr.bf16.mxu0 %v1230
    %1358 = vmatpush1.bf16.msra.mxu0 %v1229
    %1359 = vmatprep.subr.bf16.mxu0 %v1234
    %1360 = vmatpush1.bf16.msra.mxu0 %v1233
    %1361 = vmatprep.subr.bf16.mxu0 %v1238
    %1362 = vmatpush1.bf16.msra.mxu0 %v1237
    %1363 = vmatprep.subr.bf16.mxu0 %v1242
    %1364 = vmatpush1.bf16.msra.mxu0 %v1241
    %1365 = vmatprep.subr.bf16.mxu0 %v1246
    %1366 = vmatpush1.bf16.msra.mxu0 %v1245
    %1367 = vmatprep.subr.bf16.mxu0 %v1250
    %1368 = vmatpush1.bf16.msra.mxu0 %v1249
    %1369 = vmatprep.subr.bf16.mxu0 %v1254
    %1370 = vmatpush1.bf16.msra.mxu0 %v1253
    %1371 = vmatprep.subr.bf16.mxu0 %v1258
    %1372 = vmatpush1.bf16.msra.mxu0 %v1257
    %1373 = vmatprep.subr.bf16.mxu0 %v1262
    %1374 = vmatpush1.bf16.msra.mxu0 %v1261
    %1375 = vmatprep.subr.bf16.mxu0 %v1266
    %1376 = vmatpush1.bf16.msra.mxu0 %v1265
    %1377 = vmatprep.subr.bf16.mxu0 %v1270
    %1378 = vmatpush1.bf16.msra.mxu0 %v1269
    %1379 = vmatprep.subr.bf16.mxu0 %v1274
    %1380 = vmatpush1.bf16.msra.mxu0 %v1273
    %1381 = vmatprep.subr.bf16.mxu0 %v1278
    %1382 = vmatpush1.bf16.msra.mxu0 %v1277
    %1383 = vmatprep.subr.bf16.mxu0 %v1282
    %1384 = vmatpush1.bf16.msra.mxu0 %v1281
    %1385 = vmatprep.subr.bf16.mxu0 %v1286
    %1386 = vmatpush1.bf16.msra.mxu0 %v1285
    %1387 = vmatprep.subr.bf16.mxu0 %v1290
    %1388 = vmatpush1.bf16.msra.mxu0 %v1289
    %1389 = vmatprep.mubr.bf16.mxu0 %v972
    %1390 = vmatmul.mubr.bf16.gmra.mrb[0].mxu0 %v971
    %v1391 = vpop.f32.mrb[0].mxu0
    %v1392 = vadd.f32 0.0, %v1391
    %v1393 = vpop.f32.mrb[0].mxu0
    %v1394 = vadd.f32 0.0, %v1393
    %v1395 = vpop.f32.mrb[0].mxu0
    %v1396 = vpop.f32.mrb[0].mxu0
    %1397 = vdwg.mxu0
    %1398 = vmatprep.subr.bf16.mxu0 %v1232
    %1399 = vmatpush1.bf16.msra.mxu0 %v1231
    %1400 = vmatprep.subr.bf16.mxu0 %v1236
    %1401 = vmatpush1.bf16.msra.mxu0 %v1235
    %1402 = vmatprep.subr.bf16.mxu0 %v1240
    %1403 = vmatpush1.bf16.msra.mxu0 %v1239
    %1404 = vmatprep.subr.bf16.mxu0 %v1244
    %1405 = vmatpush1.bf16.msra.mxu0 %v1243
    %1406 = vmatprep.subr.bf16.mxu0 %v1248
    %1407 = vmatpush1.bf16.msra.mxu0 %v1247
    %1408 = vmatprep.subr.bf16.mxu0 %v1252
    %1409 = vmatpush1.bf16.msra.mxu0 %v1251
    %1410 = vmatprep.subr.bf16.mxu0 %v1256
    %1411 = vmatpush1.bf16.msra.mxu0 %v1255
    %1412 = vmatprep.subr.bf16.mxu0 %v1260
    %1413 = vmatpush1.bf16.msra.mxu0 %v1259
    %1414 = vmatprep.subr.bf16.mxu0 %v1264
    %1415 = vmatpush1.bf16.msra.mxu0 %v1263
    %1416 = vmatprep.subr.bf16.mxu0 %v1268
    %1417 = vmatpush1.bf16.msra.mxu0 %v1267
    %1418 = vmatprep.subr.bf16.mxu0 %v1272
    %1419 = vmatpush1.bf16.msra.mxu0 %v1271
    %1420 = vmatprep.subr.bf16.mxu0 %v1276
    %1421 = vmatpush1.bf16.msra.mxu0 %v1275
    %1422 = vmatprep.subr.bf16.mxu0 %v1280
    %1423 = vmatpush1.bf16.msra.mxu0 %v1279
    %1424 = vmatprep.subr.bf16.mxu0 %v1284
    %1425 = vmatpush1.bf16.msra.mxu0 %v1283
    %1426 = vmatprep.subr.bf16.mxu0 %v1288
    %1427 = vmatpush1.bf16.msra.mxu0 %v1287
    %1428 = vmatprep.subr.bf16.mxu0 %v1292
    %1429 = vmatpush1.bf16.msra.mxu0 %v1291
    %1430 = vmatprep.mubr.bf16.mxu0 %v972
    %1431 = vmatmul.mubr.bf16.gmra.mrb[0].mxu0 %v971
    %v1432 = vpop.f32.mrb[0].mxu0
    %v1433 = vadd.f32 0.0, %v1432
    %v1434 = vpop.f32.mrb[0].mxu0
    %v1435 = vadd.f32 0.0, %v1434
    %v1436 = vpop.f32.mrb[0].mxu0
    %v1437 = vpop.f32.mrb[0].mxu0
    %1438 = vdwg.mxu0
    %1439 = vmatprep.subr.mxu0 %v1394
    %1440 = vmatpush1.msra.mxu0 %v1392
    %1441 = vmatprep.subr.mxu0 0.0
    %1442 = vmatpush1.msra.mxu0 0.0
    %1443 = vmatprep.subr.mxu0 0.0
    %1444 = vmatpush1.msra.mxu0 0.0
    %1445 = vmatprep.subr.mxu0 0.0
    %1446 = vmatpush1.msra.mxu0 0.0
    %1447 = vmatprep.subr.mxu0 0.0
    %1448 = vmatpush1.msra.mxu0 0.0
    %1449 = vmatprep.subr.mxu0 0.0
    %1450 = vmatpush1.msra.mxu0 0.0
    %1451 = vmatprep.subr.mxu0 0.0
    %1452 = vmatpush1.msra.mxu0 0.0
    %1453 = vmatprep.subr.mxu0 0.0
    %1454 = vmatpush1.msra.mxu0 0.0
    %1455 = vmatprep.subr.mxu0 0.0
    %1456 = vmatpush1.msra.mxu0 0.0
    %1457 = vmatprep.subr.mxu0 0.0
    %1458 = vmatpush1.msra.mxu0 0.0
    %1459 = vmatprep.subr.mxu0 0.0
    %1460 = vmatpush1.msra.mxu0 0.0
    %1461 = vmatprep.subr.mxu0 0.0
    %1462 = vmatpush1.msra.mxu0 0.0
    %1463 = vmatprep.subr.mxu0 0.0
    %1464 = vmatpush1.msra.mxu0 0.0
    %1465 = vmatprep.subr.mxu0 0.0
    %1466 = vmatpush1.msra.mxu0 0.0
    %1467 = vmatprep.subr.mxu0 0.0
    %1468 = vmatpush1.msra.mxu0 0.0
    %1469 = vmatprep.subr.mxu0 0.0
    %1470 = vmatpush1.msra.mxu0 0.0
    %1471 = vmatprep.subr.mxu0 0.0
    %1472 = vmatpush1.msra.mxu0 0.0
    %1473 = vmatprep.subr.mxu0 0.0
    %1474 = vmatpush1.msra.mxu0 0.0
    %1475 = vmatprep.subr.mxu0 0.0
    %1476 = vmatpush1.msra.mxu0 0.0
    %1477 = vmatprep.subr.mxu0 0.0
    %1478 = vmatpush1.msra.mxu0 0.0
    %1479 = vmatprep.subr.mxu0 0.0
    %1480 = vmatpush1.msra.mxu0 0.0
    %1481 = vmatprep.subr.mxu0 0.0
    %1482 = vmatpush1.msra.mxu0 0.0
    %1483 = vmatprep.subr.mxu0 0.0
    %1484 = vmatpush1.msra.mxu0 0.0
    %1485 = vmatprep.subr.mxu0 0.0
    %1486 = vmatpush1.msra.mxu0 0.0
    %1487 = vmatprep.subr.mxu0 0.0
    %1488 = vmatpush1.msra.mxu0 0.0
    %1489 = vmatprep.subr.mxu0 0.0
    %1490 = vmatpush1.msra.mxu0 0.0
    %1491 = vmatprep.subr.mxu0 0.0
    %1492 = vmatpush1.msra.mxu0 0.0
    %1493 = vmatprep.subr.mxu0 0.0
    %1494 = vmatpush1.msra.mxu0 0.0
    %1495 = vmatprep.subr.mxu0 0.0
    %1496 = vmatpush1.msra.mxu0 0.0
    %1497 = vmatprep.subr.mxu0 0.0
    %1498 = vmatpush1.msra.mxu0 0.0
    %1499 = vmatprep.subr.mxu0 0.0
    %1500 = vmatpush1.msra.mxu0 0.0
    %1501 = vmatprep.subr.mxu0 0.0
    %1502 = vmatpush1.msra.mxu0 0.0
    %1503 = vmatprep.mubr.f32.mxu0 0.0
    %1504 = vmatmul.mubr.f32.gmra.mrb[0].mxu0 %v452
    %v1505 = vpop.f32.mrb[0].mxu0
    %v1506 = vadd.f32 0.0, %v1505
    %v1507 = vpop.f32.mrb[0].mxu0
    %v1508 = vadd.f32 0.0, %v1507
    %1509 = vdwg.mxu0
    %1510 = vmatprep.subr.mxu0 %v1435
    %1511 = vmatpush1.msra.mxu0 %v1433
    %1512 = vmatprep.subr.mxu0 0.0
    %1513 = vmatpush1.msra.mxu0 0.0
    %1514 = vmatprep.subr.mxu0 0.0
    %1515 = vmatpush1.msra.mxu0 0.0
    %1516 = vmatprep.subr.mxu0 0.0
    %1517 = vmatpush1.msra.mxu0 0.0
    %1518 = vmatprep.subr.mxu0 0.0
    %1519 = vmatpush1.msra.mxu0 0.0
    %1520 = vmatprep.subr.mxu0 0.0
    %1521 = vmatpush1.msra.mxu0 0.0
    %1522 = vmatprep.subr.mxu0 0.0
    %1523 = vmatpush1.msra.mxu0 0.0
    %1524 = vmatprep.subr.mxu0 0.0
    %1525 = vmatpush1.msra.mxu0 0.0
    %1526 = vmatprep.subr.mxu0 0.0
    %1527 = vmatpush1.msra.mxu0 0.0
    %1528 = vmatprep.subr.mxu0 0.0
    %1529 = vmatpush1.msra.mxu0 0.0
    %1530 = vmatprep.subr.mxu0 0.0
    %1531 = vmatpush1.msra.mxu0 0.0
    %1532 = vmatprep.subr.mxu0 0.0
    %1533 = vmatpush1.msra.mxu0 0.0
    %1534 = vmatprep.subr.mxu0 0.0
    %1535 = vmatpush1.msra.mxu0 0.0
    %1536 = vmatprep.subr.mxu0 0.0
    %1537 = vmatpush1.msra.mxu0 0.0
    %1538 = vmatprep.subr.mxu0 0.0
    %1539 = vmatpush1.msra.mxu0 0.0
    %1540 = vmatprep.subr.mxu0 0.0
    %1541 = vmatpush1.msra.mxu0 0.0
    %1542 = vmatprep.subr.mxu0 0.0
    %1543 = vmatpush1.msra.mxu0 0.0
    %1544 = vmatprep.subr.mxu0 0.0
    %1545 = vmatpush1.msra.mxu0 0.0
    %1546 = vmatprep.subr.mxu0 0.0
    %1547 = vmatpush1.msra.mxu0 0.0
    %1548 = vmatprep.subr.mxu0 0.0
    %1549 = vmatpush1.msra.mxu0 0.0
    %1550 = vmatprep.subr.mxu0 0.0
    %1551 = vmatpush1.msra.mxu0 0.0
    %1552 = vmatprep.subr.mxu0 0.0
    %1553 = vmatpush1.msra.mxu0 0.0
    %1554 = vmatprep.subr.mxu0 0.0
    %1555 = vmatpush1.msra.mxu0 0.0
    %1556 = vmatprep.subr.mxu0 0.0
    %1557 = vmatpush1.msra.mxu0 0.0
    %1558 = vmatprep.subr.mxu0 0.0
    %1559 = vmatpush1.msra.mxu0 0.0
    %1560 = vmatprep.subr.mxu0 0.0
    %1561 = vmatpush1.msra.mxu0 0.0
    %1562 = vmatprep.subr.mxu0 0.0
    %1563 = vmatpush1.msra.mxu0 0.0
    %1564 = vmatprep.subr.mxu0 0.0
    %1565 = vmatpush1.msra.mxu0 0.0
    %1566 = vmatprep.subr.mxu0 0.0
    %1567 = vmatpush1.msra.mxu0 0.0
    %1568 = vmatprep.subr.mxu0 0.0
    %1569 = vmatpush1.msra.mxu0 0.0
    %1570 = vmatprep.subr.mxu0 0.0
    %1571 = vmatpush1.msra.mxu0 0.0
    %1572 = vmatprep.subr.mxu0 0.0
    %1573 = vmatpush1.msra.mxu0 0.0
    %1574 = vmatprep.mubr.f32.mxu0 0.0
    %1575 = vmatmul.mubr.f32.gmra.mrb[0].mxu0 %v452
    %v1576 = vpop.f32.mrb[0].mxu0
    %v1577 = vadd.f32 0.0, %v1576
    %v1578 = vpop.f32.mrb[0].mxu0
    %v1579 = vadd.f32 0.0, %v1578
    %1580 = vdwg.mxu0
    %v1581 = vmul.f32 %v1392, %v1392
    %v1582 = vmul.f32 %v1394, %v1394
    %v1583 = vmul.f32 %v1433, %v1433
    %v1584 = vmul.f32 %v1435, %v1435
    %1585 = vmatprep.subr.mxu0 %v1582
    %1586 = vmatpush1.msra.mxu0 %v1581
    %1587 = vmatprep.subr.mxu0 0.0
    %1588 = vmatpush1.msra.mxu0 0.0
    %1589 = vmatprep.subr.mxu0 0.0
    %1590 = vmatpush1.msra.mxu0 0.0
    %1591 = vmatprep.subr.mxu0 0.0
    %1592 = vmatpush1.msra.mxu0 0.0
    %1593 = vmatprep.subr.mxu0 0.0
    %1594 = vmatpush1.msra.mxu0 0.0
    %1595 = vmatprep.subr.mxu0 0.0
    %1596 = vmatpush1.msra.mxu0 0.0
    %1597 = vmatprep.subr.mxu0 0.0
    %1598 = vmatpush1.msra.mxu0 0.0
    %1599 = vmatprep.subr.mxu0 0.0
    %1600 = vmatpush1.msra.mxu0 0.0
    %1601 = vmatprep.subr.mxu0 0.0
    %1602 = vmatpush1.msra.mxu0 0.0
    %1603 = vmatprep.subr.mxu0 0.0
    %1604 = vmatpush1.msra.mxu0 0.0
    %1605 = vmatprep.subr.mxu0 0.0
    %1606 = vmatpush1.msra.mxu0 0.0
    %1607 = vmatprep.subr.mxu0 0.0
    %1608 = vmatpush1.msra.mxu0 0.0
    %1609 = vmatprep.subr.mxu0 0.0
    %1610 = vmatpush1.msra.mxu0 0.0
    %1611 = vmatprep.subr.mxu0 0.0
    %1612 = vmatpush1.msra.mxu0 0.0
    %1613 = vmatprep.subr.mxu0 0.0
    %1614 = vmatpush1.msra.mxu0 0.0
    %1615 = vmatprep.subr.mxu0 0.0
    %1616 = vmatpush1.msra.mxu0 0.0
    %1617 = vmatprep.subr.mxu0 0.0
    %1618 = vmatpush1.msra.mxu0 0.0
    %1619 = vmatprep.subr.mxu0 0.0
    %1620 = vmatpush1.msra.mxu0 0.0
    %1621 = vmatprep.subr.mxu0 0.0
    %1622 = vmatpush1.msra.mxu0 0.0
    %1623 = vmatprep.subr.mxu0 0.0
    %1624 = vmatpush1.msra.mxu0 0.0
    %1625 = vmatprep.subr.mxu0 0.0
    %1626 = vmatpush1.msra.mxu0 0.0
    %1627 = vmatprep.subr.mxu0 0.0
    %1628 = vmatpush1.msra.mxu0 0.0
    %1629 = vmatprep.subr.mxu0 0.0
    %1630 = vmatpush1.msra.mxu0 0.0
    %1631 = vmatprep.subr.mxu0 0.0
    %1632 = vmatpush1.msra.mxu0 0.0
    %1633 = vmatprep.subr.mxu0 0.0
    %1634 = vmatpush1.msra.mxu0 0.0
    %1635 = vmatprep.subr.mxu0 0.0
    %1636 = vmatpush1.msra.mxu0 0.0
    %1637 = vmatprep.subr.mxu0 0.0
    %1638 = vmatpush1.msra.mxu0 0.0
    %1639 = vmatprep.subr.mxu0 0.0
    %1640 = vmatpush1.msra.mxu0 0.0
    %1641 = vmatprep.subr.mxu0 0.0
    %1642 = vmatpush1.msra.mxu0 0.0
    %1643 = vmatprep.subr.mxu0 0.0
    %1644 = vmatpush1.msra.mxu0 0.0
    %1645 = vmatprep.subr.mxu0 0.0
    %1646 = vmatpush1.msra.mxu0 0.0
    %1647 = vmatprep.subr.mxu0 0.0
    %1648 = vmatpush1.msra.mxu0 0.0
    %1649 = vmatprep.mubr.f32.mxu0 0.0
    %1650 = vmatmul.mubr.f32.gmra.mrb[0].mxu0 %v452
    %v1651 = vpop.f32.mrb[0].mxu0
    %v1652 = vadd.f32 0.0, %v1651
    %v1653 = vpop.f32.mrb[0].mxu0
    %v1654 = vadd.f32 0.0, %v1653
    %1655 = vdwg.mxu0
    %1656 = vmatprep.subr.mxu0 %v1584
    %1657 = vmatpush1.msra.mxu0 %v1583
    %1658 = vmatprep.subr.mxu0 0.0
    %1659 = vmatpush1.msra.mxu0 0.0
    %1660 = vmatprep.subr.mxu0 0.0
    %1661 = vmatpush1.msra.mxu0 0.0
    %1662 = vmatprep.subr.mxu0 0.0
    %1663 = vmatpush1.msra.mxu0 0.0
    %1664 = vmatprep.subr.mxu0 0.0
    %1665 = vmatpush1.msra.mxu0 0.0
    %1666 = vmatprep.subr.mxu0 0.0
    %1667 = vmatpush1.msra.mxu0 0.0
    %1668 = vmatprep.subr.mxu0 0.0
    %1669 = vmatpush1.msra.mxu0 0.0
    %1670 = vmatprep.subr.mxu0 0.0
    %1671 = vmatpush1.msra.mxu0 0.0
    %1672 = vmatprep.subr.mxu0 0.0
    %1673 = vmatpush1.msra.mxu0 0.0
    %1674 = vmatprep.subr.mxu0 0.0
    %1675 = vmatpush1.msra.mxu0 0.0
    %1676 = vmatprep.subr.mxu0 0.0
    %1677 = vmatpush1.msra.mxu0 0.0
    %1678 = vmatprep.subr.mxu0 0.0
    %1679 = vmatpush1.msra.mxu0 0.0
    %1680 = vmatprep.subr.mxu0 0.0
    %1681 = vmatpush1.msra.mxu0 0.0
    %1682 = vmatprep.subr.mxu0 0.0
    %1683 = vmatpush1.msra.mxu0 0.0
    %1684 = vmatprep.subr.mxu0 0.0
    %1685 = vmatpush1.msra.mxu0 0.0
    %1686 = vmatprep.subr.mxu0 0.0
    %1687 = vmatpush1.msra.mxu0 0.0
    %1688 = vmatprep.subr.mxu0 0.0
    %1689 = vmatpush1.msra.mxu0 0.0
    %1690 = vmatprep.subr.mxu0 0.0
    %1691 = vmatpush1.msra.mxu0 0.0
    %1692 = vmatprep.subr.mxu0 0.0
    %1693 = vmatpush1.msra.mxu0 0.0
    %1694 = vmatprep.subr.mxu0 0.0
    %1695 = vmatpush1.msra.mxu0 0.0
    %1696 = vmatprep.subr.mxu0 0.0
    %1697 = vmatpush1.msra.mxu0 0.0
    %1698 = vmatprep.subr.mxu0 0.0
    %1699 = vmatpush1.msra.mxu0 0.0
    %1700 = vmatprep.subr.mxu0 0.0
    %1701 = vmatpush1.msra.mxu0 0.0
    %1702 = vmatprep.subr.mxu0 0.0
    %1703 = vmatpush1.msra.mxu0 0.0
    %1704 = vmatprep.subr.mxu0 0.0
    %1705 = vmatpush1.msra.mxu0 0.0
    %1706 = vmatprep.subr.mxu0 0.0
    %1707 = vmatpush1.msra.mxu0 0.0
    %1708 = vmatprep.subr.mxu0 0.0
    %1709 = vmatpush1.msra.mxu0 0.0
    %1710 = vmatprep.subr.mxu0 0.0
    %1711 = vmatpush1.msra.mxu0 0.0
    %1712 = vmatprep.subr.mxu0 0.0
    %1713 = vmatpush1.msra.mxu0 0.0
    %1714 = vmatprep.subr.mxu0 0.0
    %1715 = vmatpush1.msra.mxu0 0.0
    %1716 = vmatprep.subr.mxu0 0.0
    %1717 = vmatpush1.msra.mxu0 0.0
    %1718 = vmatprep.subr.mxu0 0.0
    %1719 = vmatpush1.msra.mxu0 0.0
    %1720 = vmatprep.mubr.f32.mxu0 0.0
    %1721 = vmatmul.mubr.f32.gmra.mrb[0].mxu0 %v452
    %v1722 = vpop.f32.mrb[0].mxu0
    %v1723 = vadd.f32 0.0, %v1722
    %v1724 = vpop.f32.mrb[0].mxu0
    %v1725 = vadd.f32 0.0, %v1724
    %1726 = vdwg.mxu0
    %v1727 = vmul.f32 %v1506, %v595
    %v1728 = vmul.f32 %v1508, %v595
    %v1729 = vmul.f32 %v1577, %v595
    %v1730 = vmul.f32 %v1579, %v595
    %v1731 = vmul.f32 %v1652, %v595
    %v1732 = vmul.f32 %v1654, %v595
    %v1733 = vmul.f32 %v1723, %v595
    %v1734 = vmul.f32 %v1725, %v595
    %v1735 = vmul.f32 %v1727, %v1727
    %v1736 = vmul.f32 %v1728, %v1728
    %v1737 = vmul.f32 %v1729, %v1729
    %v1738 = vmul.f32 %v1730, %v1730
    %v1739 = vsub.f32 %v1731, %v1735
    %v1740 = vsub.f32 %v1732, %v1736
    %v1741 = vsub.f32 %v1733, %v1737
    %v1742 = vsub.f32 %v1734, %v1738
    %v1743 = vmax.f32 %v1739, 0.0
    %v1744 = vmax.f32 %v1740, 0.0
    %v1745 = vmax.f32 %v1741, 0.0
    %v1746 = vmax.f32 %v1742, 0.0
    %v1747 = vadd.f32 %v1743, 0.8
    %v1748 = vadd.f32 %v1744, 0.8
    %v1749 = vadd.f32 %v1745, 0.8
    %v1750 = vadd.f32 %v1746, 0.8
    %v1751 = vrsqrt.pop %v1747
    %v1752 = vrsqrt.pop %v1748
    %v1753 = vrsqrt.pop %v1749
    %v1754 = vrsqrt.pop %v1750
    %v1759 = vrot.slane %v1751, 3
    %v1760 = vrot.slane %v1752, 3
    %v1761 = vrot.slane %v1753, 3
    %v1762 = vrot.slane %v1754, 3
    %v1767 = vmul.f32 %v97, %v1759
    %v1768 = vmul.f32 %v98, %v1760
    %v1769 = vmul.f32 %v99, %v1761
    %v1770 = vmul.f32 %v100, %v1762
    %v1775 = vrot.slane %v1767, 5
    %v1776 = vrot.slane %v1768, 5
    %v1777 = vrot.slane %v1769, 5
    %v1778 = vrot.slane %v1770, 5
    %v1783 = vmul.f32 %v1727, %v1775
    %v1784 = vmul.f32 %v1728, %v1776
    %v1785 = vmul.f32 %v1729, %v1777
    %v1786 = vmul.f32 %v1730, %v1778
    %v1791 = vrot.slane %v1783, 2
    %v1792 = vrot.slane %v1784, 2
    %v1793 = vrot.slane %v1785, 2
    %v1794 = vrot.slane %v1786, 2
    %v1799 = vsub.f32 %v97, %v1791
    %v1800 = vsub.f32 %v98, %v1792
    %v1801 = vsub.f32 %v99, %v1793
    %v1802 = vsub.f32 %v100, %v1794
    %v1803 = vlaneseq
    %v1804 = vshrl.u32 %v1803, 7
    %v1805 = vsub.s32 5, %v1804
    %v1806 = vrot.slane %v1767, %v1805
    %v1807 = vlaneseq
    %v1808 = vshrl.u32 %v1807, 7
    %v1809 = vsub.s32 5, %v1808
    %v1810 = vrot.slane %v1768, %v1809
    %v1811 = vlaneseq
    %v1812 = vshrl.u32 %v1811, 7
    %v1813 = vsub.s32 5, %v1812
    %v1814 = vrot.slane %v1769, %v1813
    %v1815 = vlaneseq
    %v1816 = vshrl.u32 %v1815, 7
    %v1817 = vsub.s32 5, %v1816
    %v1818 = vrot.slane %v1770, %v1817
    %v1819 = vmul.f32 %v1392, %v1806
    %v1820 = vmul.f32 %v1394, %v1810
    %v1821 = vmul.f32 %v1433, %v1814
    %v1822 = vmul.f32 %v1435, %v1818
    %v1823 = vlaneseq
    %v1824 = vshrl.u32 %v1823, 7
    %v1825 = vsub.s32 6, %v1824
    %v1826 = vrot.slane %v1799, %v1825
    %v1827 = vlaneseq
    %v1828 = vshrl.u32 %v1827, 7
    %v1829 = vsub.s32 6, %v1828
    %v1830 = vrot.slane %v1800, %v1829
    %v1831 = vlaneseq
    %v1832 = vshrl.u32 %v1831, 7
    %v1833 = vsub.s32 6, %v1832
    %v1834 = vrot.slane %v1801, %v1833
    %v1835 = vlaneseq
    %v1836 = vshrl.u32 %v1835, 7
    %v1837 = vsub.s32 6, %v1836
    %v1838 = vrot.slane %v1802, %v1837
    %v1839 = vadd.f32 %v1819, %v1826
    %v1840 = vadd.f32 %v1820, %v1830
    %v1841 = vadd.f32 %v1821, %v1834
    %v1842 = vadd.f32 %v1822, %v1838
    %v1843 = vmul.f32 %v1839, 0.25
    %v1844 = vmul.f32 %v1840, 0.25
    %v1845 = vmul.f32 %v1841, 0.25
    %v1846 = vmul.f32 %v1842, 0.25
    %v1847 = vmax.f32 %v1839, %v1843
    %v1848 = vmax.f32 %v1840, %v1844
    %v1849 = vmax.f32 %v1841, %v1845
    %v1850 = vmax.f32 %v1842, %v1846
    %v1851 = vpack.c.bf16 %v1847, %v1847
    %v1852 = vpack.c.bf16 %v1848, %v1848
    %v1853 = vpack.c.bf16 %v1849, %v1849
    %v1854 = vpack.c.bf16 %v1850, %v1850
    %v1855 = vld [vmem:[#allocation8] sm:$0xf]
    %v1856 = vld [vmem:[#allocation8 + $0x4] sm:$0xf]
    %v1857 = vld [vmem:[#allocation8 + $0x8] sm:$0xf]
    %v1858 = vld [vmem:[#allocation8 + $0xc] sm:$0xf]
    %v1859 = vld [vmem:[#allocation8 + $0x10] sm:$0xf]
    %v1860 = vld [vmem:[#allocation8 + $0x14] sm:$0xf]
    %v1861 = vld [vmem:[#allocation8 + $0x18] sm:$0xf]
    %v1862 = vld [vmem:[#allocation8 + $0x1c] sm:$0xf]
    %v1863 = vld [vmem:[#allocation8 + $0x20] sm:$0xf]
    %v1864 = vld [vmem:[#allocation8 + $0x24] sm:$0xf]
    %v1865 = vld [vmem:[#allocation8 + $0x28] sm:$0xf]
    %v1866 = vld [vmem:[#allocation8 + $0x2c] sm:$0xf]
    %v1867 = vld [vmem:[#allocation8 + $0x30] sm:$0xf]
    %v1868 = vld [vmem:[#allocation8 + $0x34] sm:$0xf]
    %v1869 = vld [vmem:[#allocation8 + $0x38] sm:$0xf]
    %v1870 = vld [vmem:[#allocation8 + $0x3c] sm:$0xf]
    %v1871 = vld [vmem:[#allocation8 + $0x40] sm:$0xf]
    %v1872 = vld [vmem:[#allocation8 + $0x44] sm:$0xf]
    %v1873 = vld [vmem:[#allocation8 + $0x48] sm:$0xf]
    %v1874 = vld [vmem:[#allocation8 + $0x4c] sm:$0xf]
    %v1875 = vld [vmem:[#allocation8 + $0x50] sm:$0xf]
    %v1876 = vld [vmem:[#allocation8 + $0x54] sm:$0xf]
    %v1877 = vld [vmem:[#allocation8 + $0x58] sm:$0xf]
    %v1878 = vld [vmem:[#allocation8 + $0x5c] sm:$0xf]
    %v1879 = vld [vmem:[#allocation8 + $0x60] sm:$0xf]
    %v1880 = vld [vmem:[#allocation8 + $0x64] sm:$0xf]
    %v1881 = vld [vmem:[#allocation8 + $0x68] sm:$0xf]
    %v1882 = vld [vmem:[#allocation8 + $0x6c] sm:$0xf]
    %v1883 = vld [vmem:[#allocation8 + $0x70] sm:$0xf]
    %v1884 = vld [vmem:[#allocation8 + $0x74] sm:$0xf]
    %v1885 = vld [vmem:[#allocation8 + $0x78] sm:$0xf]
    %v1886 = vld [vmem:[#allocation8 + $0x7c] sm:$0xf]
    %v1887 = vld [vmem:[#allocation8 + $0x80] sm:$0xf]
    %v1888 = vld [vmem:[#allocation8 + $0x84] sm:$0xf]
    %v1889 = vld [vmem:[#allocation8 + $0x88] sm:$0xf]
    %v1890 = vld [vmem:[#allocation8 + $0x8c] sm:$0xf]
    %v1891 = vld [vmem:[#allocation8 + $0x90] sm:$0xf]
    %v1892 = vld [vmem:[#allocation8 + $0x94] sm:$0xf]
    %v1893 = vld [vmem:[#allocation8 + $0x98] sm:$0xf]
    %v1894 = vld [vmem:[#allocation8 + $0x9c] sm:$0xf]
    %v1895 = vld [vmem:[#allocation8 + $0xa0] sm:$0xf]
    %v1896 = vld [vmem:[#allocation8 + $0xa4] sm:$0xf]
    %v1897 = vld [vmem:[#allocation8 + $0xa8] sm:$0xf]
    %v1898 = vld [vmem:[#allocation8 + $0xac] sm:$0xf]
    %v1899 = vld [vmem:[#allocation8 + $0xb0] sm:$0xf]
    %v1900 = vld [vmem:[#allocation8 + $0xb4] sm:$0xf]
    %v1901 = vld [vmem:[#allocation8 + $0xb8] sm:$0xf]
    %v1902 = vld [vmem:[#allocation8 + $0xbc] sm:$0xf]
    %v1903 = vld [vmem:[#allocation8 + $0xc0] sm:$0xf]
    %v1904 = vld [vmem:[#allocation8 + $0xc4] sm:$0xf]
    %v1905 = vld [vmem:[#allocation8 + $0xc8] sm:$0xf]
    %v1906 = vld [vmem:[#allocation8 + $0xcc] sm:$0xf]
    %v1907 = vld [vmem:[#allocation8 + $0xd0] sm:$0xf]
    %v1908 = vld [vmem:[#allocation8 + $0xd4] sm:$0xf]
    %v1909 = vld [vmem:[#allocation8 + $0xd8] sm:$0xf]
    %v1910 = vld [vmem:[#allocation8 + $0xdc] sm:$0xf]
    %v1911 = vld [vmem:[#allocation8 + $0xe0] sm:$0xf]
    %v1912 = vld [vmem:[#allocation8 + $0xe4] sm:$0xf]
    %v1913 = vld [vmem:[#allocation8 + $0xe8] sm:$0xf]
    %v1914 = vld [vmem:[#allocation8 + $0xec] sm:$0xf]
    %v1915 = vld [vmem:[#allocation8 + $0xf0] sm:$0xf]
    %v1916 = vld [vmem:[#allocation8 + $0xf4] sm:$0xf]
    %v1917 = vld [vmem:[#allocation8 + $0xf8] sm:$0xf]
    %v1918 = vld [vmem:[#allocation8 + $0xfc] sm:$0xf]
    %v1983 = vunpack.c.l.b16 %v1855
    %v1984 = vunpack.c.l.b16 %v1856
    %v1985 = vunpack.c.l.b16 %v1857
    %v1986 = vunpack.c.l.b16 %v1858
    %v1987 = vunpack.c.l.b16 %v1859
    %v1988 = vunpack.c.l.b16 %v1860
    %v1989 = vunpack.c.l.b16 %v1861
    %v1990 = vunpack.c.l.b16 %v1862
    %v1991 = vunpack.c.l.b16 %v1863
    %v1992 = vunpack.c.l.b16 %v1864
    %v1993 = vunpack.c.l.b16 %v1865
    %v1994 = vunpack.c.l.b16 %v1866
    %v1995 = vunpack.c.l.b16 %v1867
    %v1996 = vunpack.c.l.b16 %v1868
    %v1997 = vunpack.c.l.b16 %v1869
    %v1998 = vunpack.c.l.b16 %v1870
    %v1999 = vunpack.c.l.b16 %v1871
    %v2000 = vunpack.c.l.b16 %v1872
    %v2001 = vunpack.c.l.b16 %v1873
    %v2002 = vunpack.c.l.b16 %v1874
    %v2003 = vunpack.c.l.b16 %v1875
    %v2004 = vunpack.c.l.b16 %v1876
    %v2005 = vunpack.c.l.b16 %v1877
    %v2006 = vunpack.c.l.b16 %v1878
    %v2007 = vunpack.c.l.b16 %v1879
    %v2008 = vunpack.c.l.b16 %v1880
    %v2009 = vunpack.c.l.b16 %v1881
    %v2010 = vunpack.c.l.b16 %v1882
    %v2011 = vunpack.c.l.b16 %v1883
    %v2012 = vunpack.c.l.b16 %v1884
    %v2013 = vunpack.c.l.b16 %v1885
    %v2014 = vunpack.c.l.b16 %v1886
    %v2015 = vunpack.c.l.b16 %v1887
    %v2016 = vunpack.c.l.b16 %v1888
    %v2017 = vunpack.c.l.b16 %v1889
    %v2018 = vunpack.c.l.b16 %v1890
    %v2019 = vunpack.c.l.b16 %v1891
    %v2020 = vunpack.c.l.b16 %v1892
    %v2021 = vunpack.c.l.b16 %v1893
    %v2022 = vunpack.c.l.b16 %v1894
    %v2023 = vunpack.c.l.b16 %v1895
    %v2024 = vunpack.c.l.b16 %v1896
    %v2025 = vunpack.c.l.b16 %v1897
    %v2026 = vunpack.c.l.b16 %v1898
    %v2027 = vunpack.c.l.b16 %v1899
    %v2028 = vunpack.c.l.b16 %v1900
    %v2029 = vunpack.c.l.b16 %v1901
    %v2030 = vunpack.c.l.b16 %v1902
    %v2031 = vunpack.c.l.b16 %v1903
    %v2032 = vunpack.c.l.b16 %v1904
    %v2033 = vunpack.c.l.b16 %v1905
    %v2034 = vunpack.c.l.b16 %v1906
    %v2035 = vunpack.c.l.b16 %v1907
    %v2036 = vunpack.c.l.b16 %v1908
    %v2037 = vunpack.c.l.b16 %v1909
    %v2038 = vunpack.c.l.b16 %v1910
    %v2039 = vunpack.c.l.b16 %v1911
    %v2040 = vunpack.c.l.b16 %v1912
    %v2041 = vunpack.c.l.b16 %v1913
    %v2042 = vunpack.c.l.b16 %v1914
    %v2043 = vunpack.c.l.b16 %v1915
    %v2044 = vunpack.c.l.b16 %v1916
    %v2045 = vunpack.c.l.b16 %v1917
    %v2046 = vunpack.c.l.b16 %v1918
    %v2047 = vpack.c.b16 %v1984, %v1983
    %v2048 = vpack.c.b16 %v1986, %v1985
    %v2049 = vpack.c.b16 %v1988, %v1987
    %v2050 = vpack.c.b16 %v1990, %v1989
    %v2051 = vpack.c.b16 %v1992, %v1991
    %v2052 = vpack.c.b16 %v1994, %v1993
    %v2053 = vpack.c.b16 %v1996, %v1995
    %v2054 = vpack.c.b16 %v1998, %v1997
    %v2055 = vpack.c.b16 %v2000, %v1999
    %v2056 = vpack.c.b16 %v2002, %v2001
    %v2057 = vpack.c.b16 %v2004, %v2003
    %v2058 = vpack.c.b16 %v2006, %v2005
    %v2059 = vpack.c.b16 %v2008, %v2007
    %v2060 = vpack.c.b16 %v2010, %v2009
    %v2061 = vpack.c.b16 %v2012, %v2011
    %v2062 = vpack.c.b16 %v2014, %v2013
    %v2063 = vpack.c.b16 %v2016, %v2015
    %v2064 = vpack.c.b16 %v2018, %v2017
    %v2065 = vpack.c.b16 %v2020, %v2019
    %v2066 = vpack.c.b16 %v2022, %v2021
    %v2067 = vpack.c.b16 %v2024, %v2023
    %v2068 = vpack.c.b16 %v2026, %v2025
    %v2069 = vpack.c.b16 %v2028, %v2027
    %v2070 = vpack.c.b16 %v2030, %v2029
    %v2071 = vpack.c.b16 %v2032, %v2031
    %v2072 = vpack.c.b16 %v2034, %v2033
    %v2073 = vpack.c.b16 %v2036, %v2035
    %v2074 = vpack.c.b16 %v2038, %v2037
    %v2075 = vpack.c.b16 %v2040, %v2039
    %v2076 = vpack.c.b16 %v2042, %v2041
    %v2077 = vpack.c.b16 %v2044, %v2043
    %v2078 = vpack.c.b16 %v2046, %v2045
    %2111 = vmatprep.subr.bf16.mxu0 0
    %2112 = vmatpush1.bf16.msra.mxu0 %v2047
    %2113 = vmatprep.subr.bf16.mxu0 0
    %2114 = vmatpush1.bf16.msra.mxu0 %v2048
    %2115 = vmatprep.subr.bf16.mxu0 0
    %2116 = vmatpush1.bf16.msra.mxu0 %v2049
    %2117 = vmatprep.subr.bf16.mxu0 0
    %2118 = vmatpush1.bf16.msra.mxu0 %v2050
    %2119 = vmatprep.subr.bf16.mxu0 0
    %2120 = vmatpush1.bf16.msra.mxu0 %v2051
    %2121 = vmatprep.subr.bf16.mxu0 0
    %2122 = vmatpush1.bf16.msra.mxu0 %v2052
    %2123 = vmatprep.subr.bf16.mxu0 0
    %2124 = vmatpush1.bf16.msra.mxu0 %v2053
    %2125 = vmatprep.subr.bf16.mxu0 0
    %2126 = vmatpush1.bf16.msra.mxu0 %v2054
    %2127 = vmatprep.subr.bf16.mxu0 0
    %2128 = vmatpush1.bf16.msra.mxu0 %v2055
    %2129 = vmatprep.subr.bf16.mxu0 0
    %2130 = vmatpush1.bf16.msra.mxu0 %v2056
    %2131 = vmatprep.subr.bf16.mxu0 0
    %2132 = vmatpush1.bf16.msra.mxu0 %v2057
    %2133 = vmatprep.subr.bf16.mxu0 0
    %2134 = vmatpush1.bf16.msra.mxu0 %v2058
    %2135 = vmatprep.subr.bf16.mxu0 0
    %2136 = vmatpush1.bf16.msra.mxu0 %v2059
    %2137 = vmatprep.subr.bf16.mxu0 0
    %2138 = vmatpush1.bf16.msra.mxu0 %v2060
    %2139 = vmatprep.subr.bf16.mxu0 0
    %2140 = vmatpush1.bf16.msra.mxu0 %v2061
    %2141 = vmatprep.subr.bf16.mxu0 0
    %2142 = vmatpush1.bf16.msra.mxu0 %v2062
    %2143 = vmatprep.mubr.bf16.mxu0 %v1852
    %2144 = vmatmul.mubr.bf16.gmra.mrb[0].mxu0 %v1851
    %v2145 = vpop.f32.mrb[0].mxu0
    %v2146 = vadd.f32 0.0, %v2145
    %v2147 = vpop.f32.mrb[0].mxu0
    %v2148 = vpop.f32.mrb[0].mxu0
    %v2149 = vpop.f32.mrb[0].mxu0
    %2150 = vdwg.mxu0
    %2151 = vmatprep.subr.bf16.mxu0 0
    %2152 = vmatpush1.bf16.msra.mxu0 %v2063
    %2153 = vmatprep.subr.bf16.mxu0 0
    %2154 = vmatpush1.bf16.msra.mxu0 %v2064
    %2155 = vmatprep.subr.bf16.mxu0 0
    %2156 = vmatpush1.bf16.msra.mxu0 %v2065
    %2157 = vmatprep.subr.bf16.mxu0 0
    %2158 = vmatpush1.bf16.msra.mxu0 %v2066
    %2159 = vmatprep.subr.bf16.mxu0 0
    %2160 = vmatpush1.bf16.msra.mxu0 %v2067
    %2161 = vmatprep.subr.bf16.mxu0 0
    %2162 = vmatpush1.bf16.msra.mxu0 %v2068
    %2163 = vmatprep.subr.bf16.mxu0 0
    %2164 = vmatpush1.bf16.msra.mxu0 %v2069
    %2165 = vmatprep.subr.bf16.mxu0 0
    %2166 = vmatpush1.bf16.msra.mxu0 %v2070
    %2167 = vmatprep.subr.bf16.mxu0 0
    %2168 = vmatpush1.bf16.msra.mxu0 %v2071
    %2169 = vmatprep.subr.bf16.mxu0 0
    %2170 = vmatpush1.bf16.msra.mxu0 %v2072
    %2171 = vmatprep.subr.bf16.mxu0 0
    %2172 = vmatpush1.bf16.msra.mxu0 %v2073
    %2173 = vmatprep.subr.bf16.mxu0 0
    %2174 = vmatpush1.bf16.msra.mxu0 %v2074
    %2175 = vmatprep.subr.bf16.mxu0 0
    %2176 = vmatpush1.bf16.msra.mxu0 %v2075
    %2177 = vmatprep.subr.bf16.mxu0 0
    %2178 = vmatpush1.bf16.msra.mxu0 %v2076
    %2179 = vmatprep.subr.bf16.mxu0 0
    %2180 = vmatpush1.bf16.msra.mxu0 %v2077
    %2181 = vmatprep.subr.bf16.mxu0 0
    %2182 = vmatpush1.bf16.msra.mxu0 %v2078
    %2183 = vmatprep.mubr.bf16.mxu0 %v1854
    %2184 = vmatmul.mubr.bf16.gmra.mrb[0].mxu0 %v1853
    %v2185 = vpop.f32.mrb[0].mxu0
    %v2186 = vadd.f32 %v2146, %v2185
    %v2187 = vpop.f32.mrb[0].mxu0
    %v2188 = vpop.f32.mrb[0].mxu0
    %v2189 = vpop.f32.mrb[0].mxu0
    %2190 = vdwg.mxu0
    %v2191 = vtanh.pop %v2186
    %2192 = vst [vmem:[%s8] sm:$0xff] %v2191
    // Predicated region
    $region50: #{limb_length_generator_forward.1} parent=1 // pred_check
      _
    $region51: #{limb_length_generator_forward.1} parent=1 // pred_check_branch
      %2194 = sbr.rel (0) target = $region53
    $region52: #{limb_length_generator_forward.1} parent=1 // pred_region
      _
    $region53: #{limb_length_generator_forward.1} parent=1 // pred_fallthru
      _
    // Predicated region
    $region54: #{limb_length_generator_forward.1} parent=1 // pred_check
      _
    $region55: #{limb_length_generator_forward.1} parent=1 // pred_check_branch
      %2196 = sbr.rel (0) target = $region57
    $region56: #{limb_length_generator_forward.1} parent=1 // pred_region
      _
    $region57: #{limb_length_generator_forward.1} parent=1 // pred_fallthru
      _
    %2197 = vsyncpa [#allocation4], 1
    %2198 = vsyncpa [#allocation6], 1
    %2199 = vsyncpa [#allocation9], 1

</llo_original>
